<compile_context>
chip_gen: v6e
topology: v6e:2x2x1
jax: 0.10.0
libtpu: 0.0.40
codegen_flags: <defaults>
</compile_context>

<pallas_src>
import functools
import numpy as np

import jax
import jax.numpy as jnp
from jax.experimental import pallas as pl
from jax.experimental.pallas import tpu as pltpu


# ----------------------------------------------------------------------------
# Generation-aware VMEM budget (v7x: 64 MiB/TC, v5e/v6e: 128 MiB).
# ----------------------------------------------------------------------------
def _vmem_limit_bytes():
    try:
        cap = int(pltpu.get_tpu_info().vmem_capacity_bytes)
        if cap > 0:
            return int(min(cap * 3 // 4, 96 * 1024 * 1024))
    except Exception:
        pass
    return 48 * 1024 * 1024


VMEM_LIMIT = _vmem_limit_bytes()
MM_TILE_M = 256    # matmul rows per tile (multiple of 8)
ELT_TILE_M = 512   # elementwise / reduction rows per tile


def _round_up(x, m):
    return ((x + m - 1) // m) * m


def _pad_rows(x2d, mp):
    m = x2d.shape[0]
    if m == mp:
        return x2d
    return jnp.pad(x2d, ((0, mp - m), (0, 0)))


def _pick_tk(K):
    """K tile: whole K when small/unaligned, else a 128-multiple divisor."""
    if K <= 1024 or K % 128 != 0:
        return K
    for tk in (1024, 768, 640, 512, 384, 256, 128):
        if K % tk == 0:
            return tk
    return K


def _flat(x):
    n, h, w, c = x.shape
    return x.reshape(n * h * w, c)


# ----------------------------------------------------------------------------
# Fused matmul kernel:
#   prologue  : x <- x*scale + shift  (folded BN)  [+ ReLU]
#   compute   : f32 accumulate of bf16 x bf16 over the K grid axis (MXU)
#   epilogue  : + bias  [+ residual add | trunk*(sigmoid(.)+1)]  [+ ReLU]
# ----------------------------------------------------------------------------
def _fused_mm_kernel(*refs, relu_in, epilogue, relu_out):
    if epilogue == "none":
        x_ref, s_ref, b_ref, w_ref, bias_ref, o_ref, acc_ref = refs
        extra_ref = None
    else:
        x_ref, s_ref, b_ref, w_ref, bias_ref, extra_ref, o_ref, acc_ref = refs

    k = pl.program_id(1)

    @pl.when(k == 0)
    def _init():
        acc_ref[...] = jnp.zeros_like(acc_ref)

    x = x_ref[...] * s_ref[...] + b_ref[...]
    if relu_in:
        x = jnp.maximum(x, 0.0)
    acc_ref[...] += jnp.dot(x.astype(jnp.bfloat16), w_ref[...],
                            preferred_element_type=jnp.float32)

    @pl.when(k == pl.num_programs(1) - 1)
    def _finalize():
        y = acc_ref[...] + bias_ref[...]
        if epilogue == "add":
            y = y + extra_ref[...]
        elif epilogue == "mask":
            y = extra_ref[...] * (jax.nn.sigmoid(y) + 1.0)
        if relu_out:
            y = jnp.maximum(y, 0.0)
        o_ref[...] = y


@functools.partial(jax.jit, static_argnames=("relu_in", "epilogue", "relu_out"))
def fused_matmul(x2d, scale, shift, w2d, bias, extra,
                 *, relu_in=False, epilogue="none", relu_out=False):
    M, K = x2d.shape
    Kw, N = w2d.shape
    assert K == Kw

    tm = min(MM_TILE_M, _round_up(M, 8))
    Mp = _round_up(M, tm)
    n_m = Mp // tm
    tk = _pick_tk(K)
    n_k = K // tk

    xp = _pad_rows(x2d.astype(jnp.float32), Mp)
    scale2 = scale.reshape(1, K).astype(jnp.float32)
    shift2 = shift.reshape(1, K).astype(jnp.float32)
    bias2 = bias.reshape(1, N).astype(jnp.float32)
    w2 = w2d.astype(jnp.bfloat16)

    in_specs = [
        pl.BlockSpec((tm, tk), lambda i, k: (i, k)),
        pl.BlockSpec((1, tk), lambda i, k: (0, k)),
        pl.BlockSpec((1, tk), lambda i, k: (0, k)),
        pl.BlockSpec((tk, N), lambda i, k: (k, 0)),
        pl.BlockSpec((1, N), lambda i, k: (0, 0)),
    ]
    inputs = [xp, scale2, shift2, w2, bias2]
    if epilogue != "none":
        in_specs.append(pl.BlockSpec((tm, N), lambda i, k: (i, 0)))
        inputs.append(_pad_rows(extra.astype(jnp.float32), Mp))

    flops = 2 * Mp * K * N
    transc = Mp * N if epilogue == "mask" else 0
    bytes_accessed = 4 * Mp * K + 2 * K * N + 4 * Mp * N * (2 if epilogue != "none" else 1)

    out = pl.pallas_call(
        functools.partial(_fused_mm_kernel, relu_in=relu_in,
                          epilogue=epilogue, relu_out=relu_out),
        out_shape=jax.ShapeDtypeStruct((Mp, N), jnp.float32),
        grid_spec=pltpu.PrefetchScalarGridSpec(
            num_scalar_prefetch=0,
            grid=(n_m, n_k),
            in_specs=in_specs,
            out_specs=pl.BlockSpec((tm, N), lambda i, k: (i, 0)),
            scratch_shapes=[pltpu.VMEM((tm, N), jnp.float32)]),
        compiler_params=pltpu.CompilerParams(
            dimension_semantics=("parallel", "arbitrary"),
            vmem_limit_bytes=VMEM_LIMIT),
        cost_estimate=pl.CostEstimate(flops=flops, transcendentals=transc,
                                      bytes_accessed=bytes_accessed),
    )(*inputs)
    return out[:M]


# ----------------------------------------------------------------------------
# Tiled per-channel statistics (training-mode BatchNorm): sum / sumsq.
# ----------------------------------------------------------------------------
def _stats_kernel(x_ref, sum_ref, ssq_ref):
    @pl.when(pl.program_id(0) == 0)
    def _init():
        sum_ref[...] = jnp.zeros_like(sum_ref)
        ssq_ref[...] = jnp.zeros_like(ssq_ref)

    x = x_ref[...]
    sum_ref[...] += jnp.sum(x, axis=0, keepdims=True)
    ssq_ref[...] += jnp.sum(x * x, axis=0, keepdims=True)


@jax.jit
def channel_stats(x2d):
    M, C = x2d.shape
    tm = min(ELT_TILE_M, _round_up(M, 8))
    Mp = _round_up(M, tm)
    n_m = Mp // tm
    xp = _pad_rows(x2d, Mp)  # zero rows contribute 0 to sum/sumsq -> exact
    s, ss = pl.pallas_call(
        _stats_kernel,
        out_shape=[jax.ShapeDtypeStruct((1, C), jnp.float32),
                   jax.ShapeDtypeStruct((1, C), jnp.float32)],
        grid_spec=pltpu.PrefetchScalarGridSpec(
            num_scalar_prefetch=0, grid=(n_m,),
            in_specs=[pl.BlockSpec((tm, C), lambda i: (i, 0))],
            out_specs=[pl.BlockSpec((1, C), lambda i: (0, 0)),
                       pl.BlockSpec((1, C), lambda i: (0, 0))]),
        compiler_params=pltpu.CompilerParams(
            dimension_semantics=("arbitrary",),
            vmem_limit_bytes=VMEM_LIMIT),
    )(xp)
    mean = s.reshape(C) / M
    var = jnp.maximum(ss.reshape(C) / M - mean * mean, 0.0)  # biased (train)
    return mean, var


def bn_scale_shift(mean, var, gamma, beta, eps=1e-5):
    inv = gamma * jax.lax.rsqrt(var + eps)
    return inv, beta - mean * inv


# ----------------------------------------------------------------------------
# Tiled elementwise kernels.
# ----------------------------------------------------------------------------
def _affine_relu_kernel(x_ref, s_ref, b_ref, o_ref):
    o_ref[...] = jnp.maximum(x_ref[...] * s_ref[...] + b_ref[...], 0.0)


@jax.jit
def affine_relu(x2d, scale, shift):
    M, C = x2d.shape
    tm = min(ELT_TILE_M, _round_up(M, 8))
    Mp = _round_up(M, tm)
    n_m = Mp // tm
    y = pl.pallas_call(
        _affine_relu_kernel,
        out_shape=jax.ShapeDtypeStruct((Mp, C), jnp.float32),
        grid_spec=pltpu.PrefetchScalarGridSpec(
            num_scalar_prefetch=0, grid=(n_m,),
            in_specs=[pl.BlockSpec((tm, C), lambda i: (i, 0)),
                      pl.BlockSpec((1, C), lambda i: (0, 0)),
                      pl.BlockSpec((1, C), lambda i: (0, 0))],
            out_specs=pl.BlockSpec((tm, C), lambda i: (i, 0))),
        compiler_params=pltpu.CompilerParams(
            dimension_semantics=("parallel",),
            vmem_limit_bytes=VMEM_LIMIT),
        input_output_aliases={0: 0},
    )(_pad_rows(x2d, Mp), scale.reshape(1, C), shift.reshape(1, C))
    return y[:M]


def _max3_kernel(a_ref, b_ref, c_ref, o_ref):
    o_ref[...] = jnp.maximum(jnp.maximum(a_ref[...], b_ref[...]), c_ref[...])


@jax.jit
def max3(a2d, b2d, c2d):
    M, C = a2d.shape
    tm = min(ELT_TILE_M, _round_up(M, 8))
    Mp = _round_up(M, tm)
    n_m = Mp // tm
    y = pl.pallas_call(
        _max3_kernel,
        out_shape=jax.ShapeDtypeStruct((Mp, C), jnp.float32),
        grid_spec=pltpu.PrefetchScalarGridSpec(
            num_scalar_prefetch=0, grid=(n_m,),
            in_specs=[pl.BlockSpec((tm, C), lambda i: (i, 0))] * 3,
            out_specs=pl.BlockSpec((tm, C), lambda i: (i, 0))),
        compiler_params=pltpu.CompilerParams(
            dimension_semantics=("parallel",),
            vmem_limit_bytes=VMEM_LIMIT),
        input_output_aliases={0: 0},
    )(_pad_rows(a2d, Mp), _pad_rows(b2d, Mp), _pad_rows(c2d, Mp))
    return y[:M]


def _add2_kernel(a_ref, b_ref, o_ref):
    o_ref[...] = a_ref[...] + b_ref[...]


@jax.jit
def add2(a2d, b2d):
    M, C = a2d.shape
    tm = min(ELT_TILE_M, _round_up(M, 8))
    Mp = _round_up(M, tm)
    n_m = Mp // tm
    y = pl.pallas_call(
        _add2_kernel,
        out_shape=jax.ShapeDtypeStruct((Mp, C), jnp.float32),
        grid_spec=pltpu.PrefetchScalarGridSpec(
            num_scalar_prefetch=0, grid=(n_m,),
            in_specs=[pl.BlockSpec((tm, C), lambda i: (i, 0))] * 2,
            out_specs=pl.BlockSpec((tm, C), lambda i: (i, 0))),
        compiler_params=pltpu.CompilerParams(
            dimension_semantics=("parallel",),
            vmem_limit_bytes=VMEM_LIMIT),
        input_output_aliases={0: 0},
    )(_pad_rows(a2d, Mp), _pad_rows(b2d, Mp))
    return y[:M]


# ----------------------------------------------------------------------------
# Conv / pool / resize wrappers (thin JAX glue, compute in Pallas).
# ----------------------------------------------------------------------------
def conv1x1(x, w_hwio, bias=None, *, stride=1, scale=None, shift=None,
            relu_in=False, relu_out=False, epilogue="none", extra2d=None):
    """1x1 conv with BN(scale/shift)+ReLU folded into the matmul prologue."""
    cout = w_hwio.shape[-1]
    if stride != 1:
        x = x[:, ::stride, ::stride, :]
    N, H, W, C = x.shape
    x2d = x.reshape(N * H * W, C)
    w2d = w_hwio.reshape(C, cout)
    if scale is None:
        scale = jnp.ones((C,), jnp.float32)
    if shift is None:
        shift = jnp.zeros((C,), jnp.float32)
    if bias is None:
        bias = jnp.zeros((cout,), jnp.float32)
    y2d = fused_matmul(x2d, scale, shift, w2d, bias, extra2d,
                       relu_in=relu_in, epilogue=epilogue, relu_out=relu_out)
    return y2d.reshape(N, H, W, cout)


def conv_kxk(x, w_hwio, bias=None, *, stride=1, relu_out=False):
    """kxk conv (pad k//2) on NHWC; any preceding BN+ReLU is applied before
    this call so that spatial zero-padding keeps the reference semantics."""
    kh, kw, cin, cout = w_hwio.shape
    pad = kh // 2
    N, H, W, C = x.shape
    xp = jnp.pad(x, ((0, 0), (pad, pad), (pad, pad), (0, 0)))
    Ho = (H + 2 * pad - kh) // stride + 1
    Wo = (W + 2 * pad - kw) // stride + 1
    # TODO(synk): move the tap loop into the kernel's K reduction grid axis
    # (Element-offset BlockSpecs on the padded input) to avoid materializing
    # the kh*kw im2col tensor in HBM; the K axis below is at least pipelined.
    cols = []
    for di in range(kh):
        for dj in range(kw):
            cols.append(xp[:, di:di + stride * (Ho - 1) + 1:stride,
                              dj:dj + stride * (Wo - 1) + 1:stride, :])
    patches = jnp.stack(cols, axis=3)                      # (N,Ho,Wo,kh*kw,C)
    K = kh * kw * cin
    x2d = patches.reshape(N * Ho * Wo, K)
    w2d = w_hwio.reshape(K, cout)
    if bias is None:
        bias = jnp.zeros((cout,), jnp.float32)
    y2d = fused_matmul(x2d, jnp.ones((K,), jnp.float32),
                       jnp.zeros((K,), jnp.float32),
                       w2d, bias, None,
                       relu_in=False, epilogue="none", relu_out=relu_out)
    return y2d.reshape(N, Ho, Wo, cout)


def maxpool2d(x, stride):
    """MaxPool2d(kernel=3, stride, padding=1), separable row-max then col-max."""
    k, pad = 3, 1
    N, H, W, C = x.shape
    xp = jnp.pad(x, ((0, 0), (pad, pad), (pad, pad), (0, 0)),
                 constant_values=-np.inf)
    Wp = W + 2 * pad
    Ho = (H + 2 * pad - k) // stride + 1
    Wo = (W + 2 * pad - k) // stride + 1
    rows = [xp[:, di:di + stride * (Ho - 1) + 1:stride, :, :] for di in range(k)]
    tmp = max3(*(r.reshape(N * Ho * Wp, C) for r in rows)).reshape(N, Ho, Wp, C)
    cols = [tmp[:, :, dj:dj + stride * (Wo - 1) + 1:stride, :] for dj in range(k)]
    out = max3(*(c.reshape(N * Ho * Wo, C) for c in cols)).reshape(N, Ho, Wo, C)
    return out


def _interp_matrix(in_size, out_size):
    # align_corners=True bilinear weights (PyTorch UpsamplingBilinear2d)
    m = np.zeros((out_size, in_size), dtype=np.float32)
    for i in range(out_size):
        src = i * (in_size - 1) / (out_size - 1) if out_size > 1 else 0.0
        lo = int(np.floor(src))
        hi = min(lo + 1, in_size - 1)
        w = src - lo
        m[i, lo] += 1.0 - w
        m[i, hi] += w
    return jnp.asarray(m)


def upsample_bilinear(x, scale):
    # plain-JAX glue: tiny interpolation matrices applied with einsum
    N, H, W, C = x.shape
    Ho = int(np.floor(H * scale))
    Wo = int(np.floor(W * scale))
    Mh = _interp_matrix(H, Ho)
    Mw = _interp_matrix(W, Wo)
    y = jnp.einsum('oh,nhwc->nowc', Mh, x)
    y = jnp.einsum('pw,nowc->nopc', Mw, y)
    return y


# ----------------------------------------------------------------------------
# Parameter construction (deterministic).  Conv weights stored in bf16 (MXU).
# ----------------------------------------------------------------------------
class KeyGen:
    def __init__(self, seed=0):
        self.key = jax.random.PRNGKey(seed)

    def next(self):
        self.key, sub = jax.random.split(self.key)
        return sub


def kaiming_conv(kg, kh, kw, cin, cout):
    fan_in = kh * kw * cin
    std = float(np.sqrt(2.0 / fan_in))
    w = jax.random.normal(kg.next(), (kh, kw, cin, cout), jnp.float32) * std
    return w.astype(jnp.bfloat16)


def make_block(kg, cin, cout, stride=1):
    mid = cout // 4
    p = {
        'stride': stride,
        'bn1': (jnp.ones((cin,), jnp.float32), jnp.zeros((cin,), jnp.float32)),
        'w1': kaiming_conv(kg, 1, 1, cin, mid),
        'bn2': (jnp.ones((mid,), jnp.float32), jnp.zeros((mid,), jnp.float32)),
        'w2': kaiming_conv(kg, 3, 3, mid, mid),
        'bn3': (jnp.ones((mid,), jnp.float32), jnp.zeros((mid,), jnp.float32)),
        'w3': kaiming_conv(kg, 1, 1, mid, cout),
    }
    if cin != cout or stride != 1:
        p['wsc'] = kaiming_conv(kg, 1, 1, cin, cout)
    return p


def make_ublock1(kg, ch):
    return ('u1', {'block': make_block(kg, ch, ch)})


def make_ublock(kg, ch, inner):
    return ('u', {'skip': make_block(kg, ch, ch),
                  'enc': make_block(kg, ch, ch),
                  'dec': make_block(kg, ch, ch)}, inner)


def make_attention(kg, ch, n_down, n_trunk=2, n_post=1, n_pre=1, n_att_conv=2):
    p = {
        'pre': [make_block(kg, ch, ch) for _ in range(n_pre)],
        'trunk': [make_block(kg, ch, ch) for _ in range(n_trunk)],
        'post': [make_block(kg, ch, ch) for _ in range(n_post)],
    }
    soft = make_ublock1(kg, ch)
    for _ in range(n_down - 1):
        soft = make_ublock(kg, ch, soft)
    p['soft'] = soft
    # mask tail: BN, ReLU, Conv1x1(bias), BN, ReLU, Conv1x1(no bias), Sigmoid
    p['mask_bn1'] = (jnp.ones((ch,), jnp.float32), jnp.zeros((ch,), jnp.float32))
    p['mask_w1'] = kaiming_conv(kg, 1, 1, ch, ch)
    p['mask_b1'] = jnp.zeros((ch,), jnp.float32)
    p['mask_bn2'] = (jnp.ones((ch,), jnp.float32), jnp.zeros((ch,), jnp.float32))
    p['mask_w2'] = kaiming_conv(kg, 1, 1, ch, ch)
    return p


def make_model(kg, in_ch=3):
    return {
        'head_w': kaiming_conv(kg, 7, 7, in_ch, 64),
        'head_b': jnp.zeros((64,), jnp.float32),
        'pre1': make_block(kg, 64, 256),
        'attn1': make_attention(kg, 256, 3),
        'pre2': make_block(kg, 256, 512, stride=2),
        'attn2': make_attention(kg, 512, 2),
        'pre3': make_block(kg, 512, 1024, stride=2),
        'attn3': make_attention(kg, 1024, 1),
        'pre4': [make_block(kg, 1024, 2048, stride=2),
                 make_block(kg, 2048, 2048),
                 make_block(kg, 2048, 2048)],
    }


# ----------------------------------------------------------------------------
# Forward passes.
# ----------------------------------------------------------------------------
def block_forward(x, p):
    """Pre-activation bottleneck residual block on NHWC (BN in training mode).
    BN+ReLU is folded into the 1x1 conv prologues; residual add is fused into
    the final conv's epilogue."""
    N, H, W, C = x.shape
    stride = p['stride']
    cout = p['w3'].shape[-1]

    mean1, var1 = channel_stats(_flat(x))
    s1, b1 = bn_scale_shift(mean1, var1, *p['bn1'])

    if 'wsc' in p:
        sc = conv1x1(x, p['wsc'], stride=stride, scale=s1, shift=b1, relu_in=True)
    else:
        sc = x

    h = conv1x1(x, p['w1'], scale=s1, shift=b1, relu_in=True)          # (N,H,W,mid)
    mid = h.shape[-1]
    mean2, var2 = channel_stats(_flat(h))
    s2, b2 = bn_scale_shift(mean2, var2, *p['bn2'])
    # BN+ReLU applied before the 3x3 conv so that its zero-padding is in
    # post-activation space (matches the reference wiring).
    h = affine_relu(_flat(h), s2, b2).reshape(N, H, W, mid)
    h = conv_kxk(h, p['w2'], stride=stride)                            # (N,Ho,Wo,mid)
    n2, Ho, Wo, _ = h.shape
    mean3, var3 = channel_stats(_flat(h))
    s3, b3 = bn_scale_shift(mean3, var3, *p['bn3'])
    out = conv1x1(h, p['w3'], scale=s3, shift=b3, relu_in=True,
                  epilogue="add", extra2d=_flat(sc))                   # fused +sc
    return out


def soft_forward(x, soft):
    if soft[0] == 'u1':
        p = soft[1]
        e = maxpool2d(x, stride=1)
        e = upsample_bilinear(e, 0.5)
        e = block_forward(e, p['block'])
        return upsample_bilinear(e, 2.0)
    _, p, inner = soft
    e = maxpool2d(x, stride=1)
    e = upsample_bilinear(e, 0.5)
    e = block_forward(e, p['enc'])
    e2 = soft_forward(e, inner)
    s = block_forward(e, p['skip'])
    e2 = add2(_flat(e2), _flat(s)).reshape(e2.shape)
    d = block_forward(e2, p['dec'])
    return upsample_bilinear(d, 2.0)


def attention_forward(x, p):
    for bp in p['pre']:
        x = block_forward(x, bp)
    t = x
    for bp in p['trunk']:
        t = block_forward(t, bp)
    # mask branch: soft trunk then BN-ReLU-1x1 (bias), BN-ReLU-1x1, sigmoid,
    # with t * (sigmoid(z)+1) fused into the last conv's epilogue.
    m = soft_forward(x, p['soft'])
    mean, var = channel_stats(_flat(m))
    s1, b1 = bn_scale_shift(mean, var, *p['mask_bn1'])
    m = conv1x1(m, p['mask_w1'], bias=p['mask_b1'], scale=s1, shift=b1, relu_in=True)
    mean, var = channel_stats(_flat(m))
    s2, b2 = bn_scale_shift(mean, var, *p['mask_bn2'])
    t = conv1x1(m, p['mask_w2'], scale=s2, shift=b2, relu_in=True,
                epilogue="mask", extra2d=_flat(t))
    for bp in p['post']:
        t = block_forward(t, bp)
    return t


def attention56_forward(x_nchw, params):
    x = jnp.transpose(x_nchw, (0, 2, 3, 1)).astype(jnp.float32)   # NCHW -> NHWC
    # head: Conv7x7 s2 (pad 3) + ReLU + MaxPool(3,2,1)
    x = conv_kxk(x, params['head_w'], bias=params['head_b'], stride=2, relu_out=True)
    x = maxpool2d(x, stride=2)
    x = block_forward(x, params['pre1'])
    x = attention_forward(x, params['attn1'])
    x = block_forward(x, params['pre2'])
    x = attention_forward(x, params['attn2'])
    x = block_forward(x, params['pre3'])
    x = attention_forward(x, params['attn3'])
    for bp in params['pre4']:
        x = block_forward(x, bp)
    return jnp.transpose(x, (0, 3, 1, 2))                          # back to NCHW


# ----------------------------------------------------------------------------
if __name__ == "__main__":
    key = jax.random.PRNGKey(0)
    k_in, _ = jax.random.split(key)

    # 32x32 is the minimum spatial size that survives the 3-level attention
    # downsampling chain.
    x = jax.random.normal(k_in, (2, 3, 32, 32), jnp.float32)

    kg = KeyGen(seed=42)
    params = make_model(kg, in_ch=3)

    y = attention56_forward(x, params)
    y = jax.block_until_ready(y)

    assert y.shape == (2, 2048, 1, 1), y.shape
    assert bool(jnp.all(jnp.isfinite(y)))
    print("KERNEL_OK")
</pallas_src>

<mosaic_0001>
module attributes {stable_mosaic.version = 11 : i64} {
  func.func @_fused_mm_kernel(%arg0: i32, %arg1: i32, %arg2: memref<256x147xf32, #tpu.memory_space<vmem>>, %arg3: memref<1x147xf32, #tpu.memory_space<vmem>>, %arg4: memref<1x147xf32, #tpu.memory_space<vmem>>, %arg5: memref<147x64xbf16, #tpu.memory_space<vmem>>, %arg6: memref<1x64xf32, #tpu.memory_space<vmem>>, %arg7: memref<256x64xf32, #tpu.memory_space<vmem>>, %arg8: memref<256x64xf32, #tpu.memory_space<vmem>>) attributes {dimension_semantics = [#tpu.dimension_semantics<parallel>, #tpu.dimension_semantics<arbitrary>], iteration_bounds = array<i64: 2, 1>, scalar_prefetch = 0 : i64, scratch_operands = 1 : i64, tpu.core_type = #tpu.core_type<tc>, window_params = [{transform_indices = @transform_0, window_bounds = array<i64: 256, 147>}, {transform_indices = @transform_1, window_bounds = array<i64: 1, 147>}, {transform_indices = @transform_2, window_bounds = array<i64: 1, 147>}, {transform_indices = @transform_3, window_bounds = array<i64: 147, 64>}, {pipeline_mode = #tpu.pipeline_mode<synchronous>, transform_indices = @transform_4, window_bounds = array<i64: 1, 64>}, {transform_indices = @transform_5, window_bounds = array<i64: 256, 64>}]} {
    %c0_i32 = arith.constant 0 : i32
    %0 = arith.cmpi eq, %arg1, %c0_i32 : i32
    %1 = arith.extui %0 : i1 to i32
    %c0_i32_0 = arith.constant 0 : i32
    %2 = arith.cmpi ne, %1, %c0_i32_0 : i32
    scf.if %2 {
      %cst_14 = arith.constant 0.000000e+00 : f32
      %19 = vector.broadcast %cst_14 : f32 to vector<256x64xf32>
      %c0_15 = arith.constant 0 : index
      %c0_16 = arith.constant 0 : index
      %20 = vector.load %arg8[%c0_15, %c0_16] : memref<256x64xf32, #tpu.memory_space<vmem>>, vector<256x64xf32>
      tpu.vector_store %arg8[%c0_15, %c0_16], %19 {strides = array<i32>} : memref<256x64xf32, #tpu.memory_space<vmem>>, vector<256x64xf32>,
    } else {
    }
    %c0 = arith.constant 0 : index
    %c0_1 = arith.constant 0 : index
    %3 = vector.load %arg2[%c0, %c0_1] : memref<256x147xf32, #tpu.memory_space<vmem>>, vector<256x147xf32>
    %c0_2 = arith.constant 0 : index
    %c0_3 = arith.constant 0 : index
    %4 = vector.load %arg3[%c0_2, %c0_3] : memref<1x147xf32, #tpu.memory_space<vmem>>, vector<1x147xf32>
    %5 = vector.broadcast %4 : vector<1x147xf32> to vector<256x147xf32>
    %6 = arith.mulf %3, %5 : vector<256x147xf32>
    %c0_4 = arith.constant 0 : index
    %c0_5 = arith.constant 0 : index
    %7 = vector.load %arg4[%c0_4, %c0_5] : memref<1x147xf32, #tpu.memory_space<vmem>>, vector<1x147xf32>
    %8 = vector.broadcast %7 : vector<1x147xf32> to vector<256x147xf32>
    %9 = arith.addf %6, %8 : vector<256x147xf32>
    %c0_6 = arith.constant 0 : index
    %c0_7 = arith.constant 0 : index
    %10 = vector.load %arg8[%c0_6, %c0_7] : memref<256x64xf32, #tpu.memory_space<vmem>>, vector<256x64xf32>
    %11 = arith.truncf %9 : vector<256x147xf32> to vector<256x147xbf16>
    %c0_8 = arith.constant 0 : index
    %c0_9 = arith.constant 0 : index
    %12 = vector.load %arg5[%c0_8, %c0_9] : memref<147x64xbf16, #tpu.memory_space<vmem>>, vector<147x64xbf16>
    %cst = arith.constant dense<0.000000e+00> : vector<256x64xf32>
    %13 = tpu.matmul %11, %12, %cst {dimension_numbers = #tpu.dot_dimension_numbers<[1], [0], [0], [1], [0, 0, 1, 1], [], []>} : vector<256x147xbf16>, vector<147x64xbf16>, vector<256x64xf32> -> vector<256x64xf32>
    %14 = arith.addf %10, %13 : vector<256x64xf32>
    %c0_10 = arith.constant 0 : index
    %c0_11 = arith.constant 0 : index
    %15 = vector.load %arg8[%c0_10, %c0_11] : memref<256x64xf32, #tpu.memory_space<vmem>>, vector<256x64xf32>
    tpu.vector_store %arg8[%c0_10, %c0_11], %14 {strides = array<i32>} : memref<256x64xf32, #tpu.memory_space<vmem>>, vector<256x64xf32>,
    %c0_i32_12 = arith.constant 0 : i32
    %16 = arith.cmpi eq, %arg1, %c0_i32_12 : i32
    %17 = arith.extui %16 : i1 to i32
    %c0_i32_13 = arith.constant 0 : i32
    %18 = arith.cmpi ne, %17, %c0_i32_13 : i32
    scf.if %18 {
      %c0_14 = arith.constant 0 : index
      %c0_15 = arith.constant 0 : index
      %19 = vector.load %arg8[%c0_14, %c0_15] : memref<256x64xf32, #tpu.memory_space<vmem>>, vector<256x64xf32>
      %c0_16 = arith.constant 0 : index
      %c0_17 = arith.constant 0 : index
      %20 = vector.load %arg6[%c0_16, %c0_17] : memref<1x64xf32, #tpu.memory_space<vmem>>, vector<1x64xf32>
      %21 = vector.broadcast %20 : vector<1x64xf32> to vector<256x64xf32>
      %22 = arith.addf %19, %21 : vector<256x64xf32>
      %cst_18 = arith.constant 0.000000e+00 : f32
      %23 = vector.broadcast %cst_18 : f32 to vector<256x64xf32>
      %24 = arith.maximumf %22, %23 : vector<256x64xf32>
      %c0_19 = arith.constant 0 : index
      %c0_20 = arith.constant 0 : index
      %25 = vector.load %arg7[%c0_19, %c0_20] : memref<256x64xf32, #tpu.memory_space<vmem>>, vector<256x64xf32>
      tpu.vector_store %arg7[%c0_19, %c0_20], %24 {strides = array<i32>} : memref<256x64xf32, #tpu.memory_space<vmem>>, vector<256x64xf32>,
    } else {
    }
    return
  }
  func.func @transform_0(%arg0: i32, %arg1: i32) -> (i32, i32) {
    %c0_i32 = arith.constant 0 : i32
    return %arg0, %arg1 : i32, i32
  }
  func.func @transform_1(%arg0: i32, %arg1: i32) -> (i32, i32) {
    %c0_i32 = arith.constant 0 : i32
    %c0_i32_0 = arith.constant 0 : i32
    return %c0_i32, %arg1 : i32, i32
  }
  func.func @transform_2(%arg0: i32, %arg1: i32) -> (i32, i32) {
    %c0_i32 = arith.constant 0 : i32
    %c0_i32_0 = arith.constant 0 : i32
    return %c0_i32, %arg1 : i32, i32
  }
  func.func @transform_3(%arg0: i32, %arg1: i32) -> (i32, i32) {
    %c0_i32 = arith.constant 0 : i32
    %c0_i32_0 = arith.constant 0 : i32
    return %arg1, %c0_i32 : i32, i32
  }
  func.func @transform_4(%arg0: i32, %arg1: i32) -> (i32, i32) {
    %c0_i32 = arith.constant 0 : i32
    %c0_i32_0 = arith.constant 0 : i32
    %c0_i32_1 = arith.constant 0 : i32
    return %c0_i32, %c0_i32_0 : i32, i32
  }
  func.func @transform_5(%arg0: i32, %arg1: i32) -> (i32, i32) {
    %c0_i32 = arith.constant 0 : i32
    %c0_i32_0 = arith.constant 0 : i32
    return %arg0, %c0_i32 : i32, i32
  }
}

</mosaic_0001>

<llo_original>
// kernel: fused_matmul.1
$region0: #{fused_matmul.1}
  #allocation0 [shape = 'u32[]', space=smem, size = 0x4, offset = 0x4, fixed_abs, tag = 'smem constant byte address 0x4 - core index']
  #allocation1 [shape = 'u32[144,128]{1,0:T(1,128)}', space=vmem, size = 0x12000, scoped, tag = 'internal scratch']
  #allocation2 [shape = 'f32[256,64]{1,0:T(8,128)}', space=vmem, size = 0x20000, scoped, tag = 'scratch operand']
  %s0 = inlined_call_operand.vmem [shape: f32[512,147], index: 0, kind: input, shape index: {}]
  %s1 = inlined_call_operand.vmem [shape: f32[1,147], index: 1, kind: input, shape index: {}]
  %s2 = inlined_call_operand.vmem [shape: f32[1,147], index: 2, kind: input, shape index: {}]
  %s3 = inlined_call_operand.vmem [shape: bf16[147,64], index: 3, kind: input, shape index: {}]
  %s4 = inlined_call_operand.vmem [shape: f32[1,64], index: 4, kind: input, shape index: {}]
  %s5 = inlined_call_operand.vmem [shape: f32[512,64], index: 5, kind: output, shape index: {}]
  %s6 = sld [smem:[#allocation0]]
  $region61: #{fused_matmul.1} parent=0
    _
  %s8 = ssub.s32 1, %s6
  %s9 = scalar_select 0, %s8, %s6
  loop: start=0, step=1, limit=4
  $region2: #{fused_matmul.1} parent=0 // loop_pre_header
    _
  $region3: #{fused_matmul.1} parent=0 // loop_header
    %s11 = sphi 0, %s15
    %p12 = scmp.ge.s32.totalorder %s11, 4
    %s18 = sphi 0, %s30
    %s19 = sphi 0, %s26
    %s20 = sphi 0, %s18
    %s21 = sphi 0, %s19
    %s22 = sphi 0, %s20
    %s23 = sphi 0, %s21
    %s35 = sphi 0, %s37
    %s38 = sphi 0, %s35
    %s39 = sphi 0, %s38
    %s55 = sphi 0, %s39
    %s61 = sphi 0, %s63
    %s64 = sphi 0, %s61
    %s65 = sphi 0, %s64
    %s81 = sphi 0, %s65
    %s87 = sphi 0, %s89
    %s90 = sphi 0, %s87
    %s91 = sphi 0, %s90
    %s107 = sphi 0, %s91
    %s113 = sphi 0, %s115
    %s116 = sphi 0, %s113
    %s117 = sphi 0, %s116
    %s133 = sphi 0, %s117
    %s137 = sphi 0, %s137
    %s139 = sphi 0, %s137
    %s140 = sphi 0, %s139
    %s154 = sphi 0, %s140
    %s160 = sphi 0, %s162
    %s163 = sphi 0, %s160
    %s164 = sphi 0, %s163
    %s180 = sphi 0, %s164
  $region4: #{fused_matmul.1} parent=0 // loop_header_branch
    %14 = sbr.rel (%p12) target = $region8
  $region5: #{fused_matmul.1} parent=0 // loop_body
    %s16 = ssub.s32 %s11, 1
    %s17 = ssub.s32 %s11, 2
    %s24 = sadd.s32 1, %s19
    %p25 = scmp.ge.s32.totalorder %s24, 1
    %s26 = scalar_select %p25, 0, %s24
    %s27 = sadd.s32 1, %s18
    %s28 = scalar_select %p25, %s27, %s18
    %p29 = scmp.ge.s32.totalorder %s28, 2
    %s30 = scalar_select %p29, 0, %s28
    %s31 = ssub.s32 %s18, %s30
    %s32 = ssub.s32 %s19, %s26
    %s33 = sor.u32 %s31, %s32
    %p34 = scmp.eq.s32.totalorder %s33, 0
    %s36 = sadd.s32 %s35, 1
    %s37 = scalar_select %p34, %s35, %s36
    %p40 = pneg %p34
    %p41 = scmp.eq.s32.totalorder %s11, 1
    %p42 = por %p40, %p41
    %p43 = scmp.ne.s32.totalorder %s35, %s38
    %p44 = scmp.eq.s32.totalorder %s11, 0
    %p45 = por %p43, %p44
    %p46 = scmp.ne.s32.totalorder %s35, %s38
    %p47 = scmp.eq.s32.totalorder %s16, 1
    %p48 = por %p46, %p47
    %p49 = scmp.ne.s32.totalorder %s38, %s39
    %p50 = scmp.eq.s32.totalorder %s16, 0
    %p51 = por %p49, %p50
    %p52 = scmp.ne.s32.totalorder %s38, %s39
    %p53 = scmp.eq.s32.totalorder %s17, 1
    %p54 = por %p52, %p53
    %p56 = scmp.ne.s32.totalorder %s39, %s55
    %p57 = scmp.eq.s32.totalorder %s17, 0
    %p58 = por %p56, %p57
    %s59 = ssub.s32 %s19, %s26
    %p60 = scmp.eq.s32.totalorder %s59, 0
    %s62 = sadd.s32 %s61, 1
    %s63 = scalar_select %p60, %s61, %s62
    %p66 = pneg %p60
    %p67 = scmp.eq.s32.totalorder %s11, 1
    %p68 = por %p66, %p67
    %p69 = scmp.ne.s32.totalorder %s61, %s64
    %p70 = scmp.eq.s32.totalorder %s11, 0
    %p71 = por %p69, %p70
    %p72 = scmp.ne.s32.totalorder %s61, %s64
    %p73 = scmp.eq.s32.totalorder %s16, 1
    %p74 = por %p72, %p73
    %p75 = scmp.ne.s32.totalorder %s64, %s65
    %p76 = scmp.eq.s32.totalorder %s16, 0
    %p77 = por %p75, %p76
    %p78 = scmp.ne.s32.totalorder %s64, %s65
    %p79 = scmp.eq.s32.totalorder %s17, 1
    %p80 = por %p78, %p79
    %p82 = scmp.ne.s32.totalorder %s65, %s81
    %p83 = scmp.eq.s32.totalorder %s17, 0
    %p84 = por %p82, %p83
    %s85 = ssub.s32 %s19, %s26
    %p86 = scmp.eq.s32.totalorder %s85, 0
    %s88 = sadd.s32 %s87, 1
    %s89 = scalar_select %p86, %s87, %s88
    %p92 = pneg %p86
    %p93 = scmp.eq.s32.totalorder %s11, 1
    %p94 = por %p92, %p93
    %p95 = scmp.ne.s32.totalorder %s87, %s90
    %p96 = scmp.eq.s32.totalorder %s11, 0
    %p97 = por %p95, %p96
    %p98 = scmp.ne.s32.totalorder %s87, %s90
    %p99 = scmp.eq.s32.totalorder %s16, 1
    %p100 = por %p98, %p99
    %p101 = scmp.ne.s32.totalorder %s90, %s91
    %p102 = scmp.eq.s32.totalorder %s16, 0
    %p103 = por %p101, %p102
    %p104 = scmp.ne.s32.totalorder %s90, %s91
    %p105 = scmp.eq.s32.totalorder %s17, 1
    %p106 = por %p104, %p105
    %p108 = scmp.ne.s32.totalorder %s91, %s107
    %p109 = scmp.eq.s32.totalorder %s17, 0
    %p110 = por %p108, %p109
    %s111 = ssub.s32 %s19, %s26
    %p112 = scmp.eq.s32.totalorder %s111, 0
    %s114 = sadd.s32 %s113, 1
    %s115 = scalar_select %p112, %s113, %s114
    %p118 = pneg %p112
    %p119 = scmp.eq.s32.totalorder %s11, 1
    %p120 = por %p118, %p119
    %p121 = scmp.ne.s32.totalorder %s113, %s116
    %p122 = scmp.eq.s32.totalorder %s11, 0
    %p123 = por %p121, %p122
    %p124 = scmp.ne.s32.totalorder %s113, %s116
    %p125 = scmp.eq.s32.totalorder %s16, 1
    %p126 = por %p124, %p125
    %p127 = scmp.ne.s32.totalorder %s116, %s117
    %p128 = scmp.eq.s32.totalorder %s16, 0
    %p129 = por %p127, %p128
    %p130 = scmp.ne.s32.totalorder %s116, %s117
    %p131 = scmp.eq.s32.totalorder %s17, 1
    %p132 = por %p130, %p131
    %p134 = scmp.ne.s32.totalorder %s117, %s133
    %p135 = scmp.eq.s32.totalorder %s17, 0
    %p136 = por %p134, %p135
    %s138 = sadd.s32 %s137, 1
    %p141 = scmp.eq.s32.totalorder %s11, 1
    %p142 = scmp.ne.s32.totalorder %s137, %s139
    %p143 = scmp.eq.s32.totalorder %s11, 0
    %p144 = por %p142, %p143
    %p145 = scmp.ne.s32.totalorder %s137, %s139
    %p146 = scmp.eq.s32.totalorder %s16, 1
    %p147 = por %p145, %p146
    %p148 = scmp.ne.s32.totalorder %s139, %s140
    %p149 = scmp.eq.s32.totalorder %s16, 0
    %p150 = por %p148, %p149
    %p151 = scmp.ne.s32.totalorder %s139, %s140
    %p152 = scmp.eq.s32.totalorder %s17, 1
    %p153 = por %p151, %p152
    %p155 = scmp.ne.s32.totalorder %s140, %s154
    %p156 = scmp.eq.s32.totalorder %s17, 0
    %p157 = por %p155, %p156
    %s158 = ssub.s32 %s18, %s30
    %p159 = scmp.eq.s32.totalorder %s158, 0
    %s161 = sadd.s32 %s160, 1
    %s162 = scalar_select %p159, %s160, %s161
    %p165 = pneg %p159
    %p166 = scmp.eq.s32.totalorder %s11, 1
    %p167 = por %p165, %p166
    %p168 = scmp.ne.s32.totalorder %s160, %s163
    %p169 = scmp.eq.s32.totalorder %s11, 0
    %p170 = por %p168, %p169
    %p171 = scmp.ne.s32.totalorder %s160, %s163
    %p172 = scmp.eq.s32.totalorder %s16, 1
    %p173 = por %p171, %p172
    %p174 = scmp.ne.s32.totalorder %s163, %s164
    %p175 = scmp.eq.s32.totalorder %s16, 0
    %p176 = por %p174, %p175
    %p177 = scmp.ne.s32.totalorder %s163, %s164
    %p178 = scmp.eq.s32.totalorder %s17, 1
    %p179 = por %p177, %p178
    %p181 = scmp.ne.s32.totalorder %s164, %s180
    %p182 = scmp.eq.s32.totalorder %s17, 0
    %p183 = por %p181, %p182
    %p184 = scmp.le.s32.totalorder 1, %s11
    %p185 = scmp.lt.s32.totalorder %s11, 3
    %p186 = pnand %p184, %p185
    %p187 = pneg %p186
    // Predicated region
    $region9: #{fused_matmul.1} parent=5 // pred_check
      _
    $region10: #{fused_matmul.1} parent=5 // pred_check_branch
      %189 = sbr.rel (%p186) target = $region12
    $region11: #{fused_matmul.1} parent=5 // pred_region
      %s190 = ssub.s32 %s11, 1
      // Predicated region
      $region13: #{fused_matmul.1} parent=11 // pred_check
        %p191 = pneg %p77
      $region14: #{fused_matmul.1} parent=11 // pred_check_branch
        %193 = sbr.rel (%p191) target = $region16
      $region15: #{fused_matmul.1} parent=11 // pred_region
        %s194 = smul.u32 2, %s21
        %p195 = scmp.lt.s32.totalorder %s194, 1
        %s196 = scalar_select %p195, %s194, 1
        %s197 = scalar_lea.vmem %s1, %s196
        %s198 = smul.u32 2, %s21
      $region16: #{fused_matmul.1} parent=11 // pred_fallthru
        _
      // Predicated region
      $region17: #{fused_matmul.1} parent=11 // pred_check
        %p199 = pneg %p103
      $region18: #{fused_matmul.1} parent=11 // pred_check_branch
        %201 = sbr.rel (%p199) target = $region20
      $region19: #{fused_matmul.1} parent=11 // pred_region
        %s202 = smul.u32 2, %s21
        %p203 = scmp.lt.s32.totalorder %s202, 1
        %s204 = scalar_select %p203, %s202, 1
        %s205 = scalar_lea.vmem %s2, %s204
        %s206 = smul.u32 2, %s21
      $region20: #{fused_matmul.1} parent=11 // pred_fallthru
        _
      // Predicated region
      $region21: #{fused_matmul.1} parent=11 // pred_check
        %p207 = pneg %p129
      $region22: #{fused_matmul.1} parent=11 // pred_check_branch
        %209 = sbr.rel (%p207) target = $region24
      $region23: #{fused_matmul.1} parent=11 // pred_region
        %s210 = smul.u32 19, %s21
        %p211 = scmp.lt.s32.totalorder %s210, 18
        %s212 = scalar_select %p211, %s210, 18
        %s213 = smul.addr %s212, 4
        %s214 = scalar_lea.vmem %s3, %s213
        %s215 = smul.u32 19, %s21
      $region24: #{fused_matmul.1} parent=11 // pred_fallthru
        _
      // Predicated region
      $region25: #{fused_matmul.1} parent=11 // pred_check
        %p216 = pneg %p150
      $region26: #{fused_matmul.1} parent=11 // pred_check_branch
        %218 = sbr.rel (%p216) target = $region28
      $region27: #{fused_matmul.1} parent=11 // pred_region
        _
      $region28: #{fused_matmul.1} parent=11 // pred_fallthru
        _
    $region12: #{fused_matmul.1} parent=5 // pred_fallthru
      _
    %p219 = scmp.lt.s32.totalorder %s11, 2
    // Predicated region
    $region29: #{fused_matmul.1} parent=5 // pred_check
      %p220 = pneg %p219
    $region30: #{fused_matmul.1} parent=5 // pred_check_branch
      %222 = sbr.rel (%p220) target = $region32
    $region31: #{fused_matmul.1} parent=5 // pred_region
      // Predicated region
      $region33: #{fused_matmul.1} parent=31 // pred_check
        %p223 = pneg %p45
      $region34: #{fused_matmul.1} parent=31 // pred_check_branch
        %225 = sbr.rel (%p223) target = $region36
      $region35: #{fused_matmul.1} parent=31 // pred_region
        %s226 = smul.u32 32, %s18
        %s227 = smul.u32 2, %s19
        %p228 = scmp.lt.s32.totalorder %s226, 63
        %s229 = scalar_select %p228, %s226, 63
        %p230 = scmp.lt.s32.totalorder %s227, 1
        %s231 = scalar_select %p230, %s227, 1
        %s232 = smul.addr %s229, 2
        %s233 = sadd.s32 %s231, %s232
        %s234 = smul.addr %s233, 8
        %s235 = scalar_lea.vmem %s0, %s234
        %s236 = smul.u32 32, %s18
        %s237 = smul.u32 2, %s19
      $region36: #{fused_matmul.1} parent=31 // pred_fallthru
        _
    $region32: #{fused_matmul.1} parent=5 // pred_fallthru
      _
    %p238 = scmp.le.s32.totalorder 1, %s11
    %p239 = scmp.lt.s32.totalorder %s11, 3
    %p240 = pnand %p238, %p239
    %p241 = pneg %p240
    // Predicated region
    $region37: #{fused_matmul.1} parent=5 // pred_check
      _
    $region38: #{fused_matmul.1} parent=5 // pred_check_branch
      %243 = sbr.rel (%p240) target = $region40
    $region39: #{fused_matmul.1} parent=5 // pred_region
      %s244 = ssub.s32 %s11, 1
      %s245 = smul.u32 32, %s20
      %s246 = smul.u32 2, %s21
      %p247 = scmp.lt.s32.totalorder %s245, 63
      %s248 = scalar_select %p247, %s245, 63
      %p249 = scmp.lt.s32.totalorder %s246, 1
      %s250 = scalar_select %p249, %s246, 1
      %s251 = smul.addr %s248, 2
      %s252 = sadd.s32 %s250, %s251
      %s253 = smul.addr %s252, 8
      %s254 = scalar_lea.vmem %s0, %s253
      %p255 = pneg %p51
      %p256 = pneg %p48
      %s257 = smul.u32 2, %s21
      %p258 = scmp.lt.s32.totalorder %s257, 1
      %s259 = scalar_select %p258, %s257, 1
      %s260 = scalar_lea.vmem %s1, %s259
      %p261 = pneg %p77
      %p262 = pneg %p74
      %s263 = smul.u32 2, %s21
      %p264 = scmp.lt.s32.totalorder %s263, 1
      %s265 = scalar_select %p264, %s263, 1
      %s266 = scalar_lea.vmem %s2, %s265
      %p267 = pneg %p103
      %p268 = pneg %p100
      %s269 = smul.u32 19, %s21
      %p270 = scmp.lt.s32.totalorder %s269, 18
      %s271 = scalar_select %p270, %s269, 18
      %s272 = smul.addr %s271, 4
      %s273 = scalar_lea.vmem %s3, %s272
      %p274 = pneg %p129
      %p275 = pneg %p126
      %p276 = pneg %p150
      %p277 = pneg %p147
      %p278 = pneg %p176
      %p279 = pneg %p173
      %s280 = smul.u32 32, %s20
      %p281 = scmp.lt.s32.totalorder %s280, 63
      %s282 = scalar_select %p281, %s280, 63
      %s283 = smul.addr %s282, 8
      %s284 = scalar_lea.vmem %s5, %s283
      %s285 = smul.u32 32, %s20
      %s286 = smul.u32 2, %s21
      %p287 = scmp.lt.s32.totalorder %s285, 63
      %s288 = scalar_select %p287, %s285, 63
      %p289 = scmp.lt.s32.totalorder %s286, 1
      %s290 = scalar_select %p289, %s286, 1
      %s291 = smul.addr %s288, 2
      %s292 = sadd.s32 %s290, %s291
      %s293 = smul.addr %s292, 8
      %s294 = scalar_lea.vmem %s0, %s293
      %s295 = smul.u32 32, %s20
      %s296 = smul.u32 2, %s21
      %s297 = smul.u32 2, %s21
      %p298 = scmp.lt.s32.totalorder %s297, 1
      %s299 = scalar_select %p298, %s297, 1
      %s300 = scalar_lea.vmem %s1, %s299
      %s301 = smul.u32 2, %s21
      %s302 = smul.u32 2, %s21
      %p303 = scmp.lt.s32.totalorder %s302, 1
      %s304 = scalar_select %p303, %s302, 1
      %s305 = scalar_lea.vmem %s2, %s304
      %s306 = smul.u32 2, %s21
      %s307 = smul.u32 19, %s21
      %p308 = scmp.lt.s32.totalorder %s307, 18
      %s309 = scalar_select %p308, %s307, 18
      %s310 = smul.addr %s309, 4
      %s311 = scalar_lea.vmem %s3, %s310
      %s312 = smul.u32 19, %s21
      %s313 = smul.u32 32, %s20
      %p314 = scmp.lt.s32.totalorder %s313, 63
      %s315 = scalar_select %p314, %s313, 63
      %s316 = smul.addr %s315, 8
      %s317 = scalar_lea.vmem %s5, %s316
      %s318 = smul.u32 32, %s20
      %p320 = scmp.eq.s32.totalorder %s21, 0
      // Predicated region
      $region41: #{fused_matmul.1} parent=39 // pred_check
        %p321 = pneg %p320
      $region42: #{fused_matmul.1} parent=39 // pred_check_branch
        %323 = sbr.rel (%p321) target = $region44
      $region43: #{fused_matmul.1} parent=39 // pred_region
        %vm324 = vcmask 523264
        %325 = vst.msk [vmem:[#allocation2] sm:$0xff] %vm324, 0.0
        %326 = vst.msk [vmem:[#allocation2 + $0x8] sm:$0xff] %vm324, 0.0
        %327 = vst.msk [vmem:[#allocation2 + $0x10] sm:$0xff] %vm324, 0.0
        %328 = vst.msk [vmem:[#allocation2 + $0x18] sm:$0xff] %vm324, 0.0
        %329 = vst.msk [vmem:[#allocation2 + $0x20] sm:$0xff] %vm324, 0.0
        %330 = vst.msk [vmem:[#allocation2 + $0x28] sm:$0xff] %vm324, 0.0
        %331 = vst.msk [vmem:[#allocation2 + $0x30] sm:$0xff] %vm324, 0.0
        %332 = vst.msk [vmem:[#allocation2 + $0x38] sm:$0xff] %vm324, 0.0
        %333 = vst.msk [vmem:[#allocation2 + $0x40] sm:$0xff] %vm324, 0.0
        %334 = vst.msk [vmem:[#allocation2 + $0x48] sm:$0xff] %vm324, 0.0
        %335 = vst.msk [vmem:[#allocation2 + $0x50] sm:$0xff] %vm324, 0.0
        %336 = vst.msk [vmem:[#allocation2 + $0x58] sm:$0xff] %vm324, 0.0
        %337 = vst.msk [vmem:[#allocation2 + $0x60] sm:$0xff] %vm324, 0.0
        %338 = vst.msk [vmem:[#allocation2 + $0x68] sm:$0xff] %vm324, 0.0
        %339 = vst.msk [vmem:[#allocation2 + $0x70] sm:$0xff] %vm324, 0.0
        %340 = vst.msk [vmem:[#allocation2 + $0x78] sm:$0xff] %vm324, 0.0
        %341 = vst.msk [vmem:[#allocation2 + $0x80] sm:$0xff] %vm324, 0.0
        %342 = vst.msk [vmem:[#allocation2 + $0x88] sm:$0xff] %vm324, 0.0
        %343 = vst.msk [vmem:[#allocation2 + $0x90] sm:$0xff] %vm324, 0.0
        %344 = vst.msk [vmem:[#allocation2 + $0x98] sm:$0xff] %vm324, 0.0
        %345 = vst.msk [vmem:[#allocation2 + $0xa0] sm:$0xff] %vm324, 0.0
        %346 = vst.msk [vmem:[#allocation2 + $0xa8] sm:$0xff] %vm324, 0.0
        %347 = vst.msk [vmem:[#allocation2 + $0xb0] sm:$0xff] %vm324, 0.0
        %348 = vst.msk [vmem:[#allocation2 + $0xb8] sm:$0xff] %vm324, 0.0
        %349 = vst.msk [vmem:[#allocation2 + $0xc0] sm:$0xff] %vm324, 0.0
        %350 = vst.msk [vmem:[#allocation2 + $0xc8] sm:$0xff] %vm324, 0.0
        %351 = vst.msk [vmem:[#allocation2 + $0xd0] sm:$0xff] %vm324, 0.0
        %352 = vst.msk [vmem:[#allocation2 + $0xd8] sm:$0xff] %vm324, 0.0
        %353 = vst.msk [vmem:[#allocation2 + $0xe0] sm:$0xff] %vm324, 0.0
        %354 = vst.msk [vmem:[#allocation2 + $0xe8] sm:$0xff] %vm324, 0.0
        %355 = vst.msk [vmem:[#allocation2 + $0xf0] sm:$0xff] %vm324, 0.0
        %356 = vst.msk [vmem:[#allocation2 + $0xf8] sm:$0xff] %vm324, 0.0
      $region44: #{fused_matmul.1} parent=39 // pred_fallthru
        _
      %v357 = vld [vmem:[%s294] sm:$0xff]
      %v358 = vld [vmem:[%s294 + $0x8] sm:$0xff]
      %v359 = vld [vmem:[%s294 + $0x10] sm:$0xff]
      %v360 = vld [vmem:[%s294 + $0x18] sm:$0xff]
      %v361 = vld [vmem:[%s294 + $0x20] sm:$0xff]
      %v362 = vld [vmem:[%s294 + $0x28] sm:$0xff]
      %v363 = vld [vmem:[%s294 + $0x30] sm:$0xff]
      %v364 = vld [vmem:[%s294 + $0x38] sm:$0xff]
      %v365 = vld [vmem:[%s294 + $0x40] sm:$0xff]
      %v366 = vld [vmem:[%s294 + $0x48] sm:$0xff]
      %v367 = vld [vmem:[%s294 + $0x50] sm:$0xff]
      %v368 = vld [vmem:[%s294 + $0x58] sm:$0xff]
      %v369 = vld [vmem:[%s294 + $0x60] sm:$0xff]
      %v370 = vld [vmem:[%s294 + $0x68] sm:$0xff]
      %v371 = vld [vmem:[%s294 + $0x70] sm:$0xff]
      %v372 = vld [vmem:[%s294 + $0x78] sm:$0xff]
      %v373 = vld [vmem:[%s294 + $0x80] sm:$0xff]
      %v374 = vld [vmem:[%s294 + $0x88] sm:$0xff]
      %v375 = vld [vmem:[%s294 + $0x90] sm:$0xff]
      %v376 = vld [vmem:[%s294 + $0x98] sm:$0xff]
      %v377 = vld [vmem:[%s294 + $0xa0] sm:$0xff]
      %v378 = vld [vmem:[%s294 + $0xa8] sm:$0xff]
      %v379 = vld [vmem:[%s294 + $0xb0] sm:$0xff]
      %v380 = vld [vmem:[%s294 + $0xb8] sm:$0xff]
      %v381 = vld [vmem:[%s294 + $0xc0] sm:$0xff]
      %v382 = vld [vmem:[%s294 + $0xc8] sm:$0xff]
      %v383 = vld [vmem:[%s294 + $0xd0] sm:$0xff]
      %v384 = vld [vmem:[%s294 + $0xd8] sm:$0xff]
      %v385 = vld [vmem:[%s294 + $0xe0] sm:$0xff]
      %v386 = vld [vmem:[%s294 + $0xe8] sm:$0xff]
      %v387 = vld [vmem:[%s294 + $0xf0] sm:$0xff]
      %v388 = vld [vmem:[%s294 + $0xf8] sm:$0xff]
      %v389 = vld [vmem:[%s294 + $0x100] sm:$0xff]
      %v390 = vld [vmem:[%s294 + $0x108] sm:$0xff]
      %v391 = vld [vmem:[%s294 + $0x110] sm:$0xff]
      %v392 = vld [vmem:[%s294 + $0x118] sm:$0xff]
      %v393 = vld [vmem:[%s294 + $0x120] sm:$0xff]
      %v394 = vld [vmem:[%s294 + $0x128] sm:$0xff]
      %v395 = vld [vmem:[%s294 + $0x130] sm:$0xff]
      %v396 = vld [vmem:[%s294 + $0x138] sm:$0xff]
      %v397 = vld [vmem:[%s294 + $0x140] sm:$0xff]
      %v398 = vld [vmem:[%s294 + $0x148] sm:$0xff]
      %v399 = vld [vmem:[%s294 + $0x150] sm:$0xff]
      %v400 = vld [vmem:[%s294 + $0x158] sm:$0xff]
      %v401 = vld [vmem:[%s294 + $0x160] sm:$0xff]
      %v402 = vld [vmem:[%s294 + $0x168] sm:$0xff]
      %v403 = vld [vmem:[%s294 + $0x170] sm:$0xff]
      %v404 = vld [vmem:[%s294 + $0x178] sm:$0xff]
      %v405 = vld [vmem:[%s294 + $0x180] sm:$0xff]
      %v406 = vld [vmem:[%s294 + $0x188] sm:$0xff]
      %v407 = vld [vmem:[%s294 + $0x190] sm:$0xff]
      %v408 = vld [vmem:[%s294 + $0x198] sm:$0xff]
      %v409 = vld [vmem:[%s294 + $0x1a0] sm:$0xff]
      %v410 = vld [vmem:[%s294 + $0x1a8] sm:$0xff]
      %v411 = vld [vmem:[%s294 + $0x1b0] sm:$0xff]
      %v412 = vld [vmem:[%s294 + $0x1b8] sm:$0xff]
      %v413 = vld [vmem:[%s294 + $0x1c0] sm:$0xff]
      %v414 = vld [vmem:[%s294 + $0x1c8] sm:$0xff]
      %v415 = vld [vmem:[%s294 + $0x1d0] sm:$0xff]
      %v416 = vld [vmem:[%s294 + $0x1d8] sm:$0xff]
      %v417 = vld [vmem:[%s294 + $0x1e0] sm:$0xff]
      %v418 = vld [vmem:[%s294 + $0x1e8] sm:$0xff]
      %v419 = vld [vmem:[%s294 + $0x1f0] sm:$0xff]
      %v420 = vld [vmem:[%s294 + $0x1f8] sm:$0xff]
      %v421 = vld [vmem:[%s300] sm:$0x3]
      %v423 = vlaneseq
      %v424 = vshrl.u32 %v423, 7
      %v425 = vsub.s32 0, %v424
      %v426 = vrot.slane %v421, %v425
      %v427 = vlaneseq
      %v428 = vshrl.u32 %v427, 7
      %v429 = vsub.s32 1, %v428
      %v430 = vrot.slane %v421, %v429
      %v433 = vmul.f32 %v357, %v426
      %v434 = vmul.f32 %v358, %v430
      %v435 = vmul.f32 %v359, %v426
      %v436 = vmul.f32 %v360, %v430
      %v437 = vmul.f32 %v361, %v426
      %v438 = vmul.f32 %v362, %v430
      %v439 = vmul.f32 %v363, %v426
      %v440 = vmul.f32 %v364, %v430
      %v441 = vmul.f32 %v365, %v426
      %v442 = vmul.f32 %v366, %v430
      %v443 = vmul.f32 %v367, %v426
      %v444 = vmul.f32 %v368, %v430
      %v445 = vmul.f32 %v369, %v426
      %v446 = vmul.f32 %v370, %v430
      %v447 = vmul.f32 %v371, %v426
      %v448 = vmul.f32 %v372, %v430
      %v449 = vmul.f32 %v373, %v426
      %v450 = vmul.f32 %v374, %v430
      %v451 = vmul.f32 %v375, %v426
      %v452 = vmul.f32 %v376, %v430
      %v453 = vmul.f32 %v377, %v426
      %v454 = vmul.f32 %v378, %v430
      %v455 = vmul.f32 %v379, %v426
      %v456 = vmul.f32 %v380, %v430
      %v457 = vmul.f32 %v381, %v426
      %v458 = vmul.f32 %v382, %v430
      %v459 = vmul.f32 %v383, %v426
      %v460 = vmul.f32 %v384, %v430
      %v461 = vmul.f32 %v385, %v426
      %v462 = vmul.f32 %v386, %v430
      %v463 = vmul.f32 %v387, %v426
      %v464 = vmul.f32 %v388, %v430
      %v465 = vmul.f32 %v389, %v426
      %v466 = vmul.f32 %v390, %v430
      %v467 = vmul.f32 %v391, %v426
      %v468 = vmul.f32 %v392, %v430
      %v469 = vmul.f32 %v393, %v426
      %v470 = vmul.f32 %v394, %v430
      %v471 = vmul.f32 %v395, %v426
      %v472 = vmul.f32 %v396, %v430
      %v473 = vmul.f32 %v397, %v426
      %v474 = vmul.f32 %v398, %v430
      %v475 = vmul.f32 %v399, %v426
      %v476 = vmul.f32 %v400, %v430
      %v477 = vmul.f32 %v401, %v426
      %v478 = vmul.f32 %v402, %v430
      %v479 = vmul.f32 %v403, %v426
      %v480 = vmul.f32 %v404, %v430
      %v481 = vmul.f32 %v405, %v426
      %v482 = vmul.f32 %v406, %v430
      %v483 = vmul.f32 %v407, %v426
      %v484 = vmul.f32 %v408, %v430
      %v485 = vmul.f32 %v409, %v426
      %v486 = vmul.f32 %v410, %v430
      %v487 = vmul.f32 %v411, %v426
      %v488 = vmul.f32 %v412, %v430
      %v489 = vmul.f32 %v413, %v426
      %v490 = vmul.f32 %v414, %v430
      %v491 = vmul.f32 %v415, %v426
      %v492 = vmul.f32 %v416, %v430
      %v493 = vmul.f32 %v417, %v426
      %v494 = vmul.f32 %v418, %v430
      %v495 = vmul.f32 %v419, %v426
      %v496 = vmul.f32 %v420, %v430
      %v497 = vld [vmem:[%s305] sm:$0x3]
      %v499 = vlaneseq
      %v500 = vshrl.u32 %v499, 7
      %v501 = vsub.s32 0, %v500
      %v502 = vrot.slane %v497, %v501
      %v503 = vlaneseq
      %v504 = vshrl.u32 %v503, 7
      %v505 = vsub.s32 1, %v504
      %v506 = vrot.slane %v497, %v505
      %v509 = vadd.f32 %v433, %v502
      %v510 = vadd.f32 %v434, %v506
      %v511 = vadd.f32 %v435, %v502
      %v512 = vadd.f32 %v436, %v506
      %v513 = vadd.f32 %v437, %v502
      %v514 = vadd.f32 %v438, %v506
      %v515 = vadd.f32 %v439, %v502
      %v516 = vadd.f32 %v440, %v506
      %v517 = vadd.f32 %v441, %v502
      %v518 = vadd.f32 %v442, %v506
      %v519 = vadd.f32 %v443, %v502
      %v520 = vadd.f32 %v444, %v506
      %v521 = vadd.f32 %v445, %v502
      %v522 = vadd.f32 %v446, %v506
      %v523 = vadd.f32 %v447, %v502
      %v524 = vadd.f32 %v448, %v506
      %v525 = vadd.f32 %v449, %v502
      %v526 = vadd.f32 %v450, %v506
      %v527 = vadd.f32 %v451, %v502
      %v528 = vadd.f32 %v452, %v506
      %v529 = vadd.f32 %v453, %v502
      %v530 = vadd.f32 %v454, %v506
      %v531 = vadd.f32 %v455, %v502
      %v532 = vadd.f32 %v456, %v506
      %v533 = vadd.f32 %v457, %v502
      %v534 = vadd.f32 %v458, %v506
      %v535 = vadd.f32 %v459, %v502
      %v536 = vadd.f32 %v460, %v506
      %v537 = vadd.f32 %v461, %v502
      %v538 = vadd.f32 %v462, %v506
      %v539 = vadd.f32 %v463, %v502
      %v540 = vadd.f32 %v464, %v506
      %v541 = vadd.f32 %v465, %v502
      %v542 = vadd.f32 %v466, %v506
      %v543 = vadd.f32 %v467, %v502
      %v544 = vadd.f32 %v468, %v506
      %v545 = vadd.f32 %v469, %v502
      %v546 = vadd.f32 %v470, %v506
      %v547 = vadd.f32 %v471, %v502
      %v548 = vadd.f32 %v472, %v506
      %v549 = vadd.f32 %v473, %v502
      %v550 = vadd.f32 %v474, %v506
      %v551 = vadd.f32 %v475, %v502
      %v552 = vadd.f32 %v476, %v506
      %v553 = vadd.f32 %v477, %v502
      %v554 = vadd.f32 %v478, %v506
      %v555 = vadd.f32 %v479, %v502
      %v556 = vadd.f32 %v480, %v506
      %v557 = vadd.f32 %v481, %v502
      %v558 = vadd.f32 %v482, %v506
      %v559 = vadd.f32 %v483, %v502
      %v560 = vadd.f32 %v484, %v506
      %v561 = vadd.f32 %v485, %v502
      %v562 = vadd.f32 %v486, %v506
      %v563 = vadd.f32 %v487, %v502
      %v564 = vadd.f32 %v488, %v506
      %v565 = vadd.f32 %v489, %v502
      %v566 = vadd.f32 %v490, %v506
      %v567 = vadd.f32 %v491, %v502
      %v568 = vadd.f32 %v492, %v506
      %v569 = vadd.f32 %v493, %v502
      %v570 = vadd.f32 %v494, %v506
      %v571 = vadd.f32 %v495, %v502
      %v572 = vadd.f32 %v496, %v506
      %v573 = vld [vmem:[#allocation2] sm:$0xff]
      %v574 = vld [vmem:[#allocation2 + $0x8] sm:$0xff]
      %v575 = vld [vmem:[#allocation2 + $0x10] sm:$0xff]
      %v576 = vld [vmem:[#allocation2 + $0x18] sm:$0xff]
      %v577 = vld [vmem:[#allocation2 + $0x20] sm:$0xff]
      %v578 = vld [vmem:[#allocation2 + $0x28] sm:$0xff]
      %v579 = vld [vmem:[#allocation2 + $0x30] sm:$0xff]
      %v580 = vld [vmem:[#allocation2 + $0x38] sm:$0xff]
      %v581 = vld [vmem:[#allocation2 + $0x40] sm:$0xff]
      %v582 = vld [vmem:[#allocation2 + $0x48] sm:$0xff]
      %v583 = vld [vmem:[#allocation2 + $0x50] sm:$0xff]
      %v584 = vld [vmem:[#allocation2 + $0x58] sm:$0xff]
      %v585 = vld [vmem:[#allocation2 + $0x60] sm:$0xff]
      %v586 = vld [vmem:[#allocation2 + $0x68] sm:$0xff]
      %v587 = vld [vmem:[#allocation2 + $0x70] sm:$0xff]
      %v588 = vld [vmem:[#allocation2 + $0x78] sm:$0xff]
      %v589 = vld [vmem:[#allocation2 + $0x80] sm:$0xff]
      %v590 = vld [vmem:[#allocation2 + $0x88] sm:$0xff]
      %v591 = vld [vmem:[#allocation2 + $0x90] sm:$0xff]
      %v592 = vld [vmem:[#allocation2 + $0x98] sm:$0xff]
      %v593 = vld [vmem:[#allocation2 + $0xa0] sm:$0xff]
      %v594 = vld [vmem:[#allocation2 + $0xa8] sm:$0xff]
      %v595 = vld [vmem:[#allocation2 + $0xb0] sm:$0xff]
      %v596 = vld [vmem:[#allocation2 + $0xb8] sm:$0xff]
      %v597 = vld [vmem:[#allocation2 + $0xc0] sm:$0xff]
      %v598 = vld [vmem:[#allocation2 + $0xc8] sm:$0xff]
      %v599 = vld [vmem:[#allocation2 + $0xd0] sm:$0xff]
      %v600 = vld [vmem:[#allocation2 + $0xd8] sm:$0xff]
      %v601 = vld [vmem:[#allocation2 + $0xe0] sm:$0xff]
      %v602 = vld [vmem:[#allocation2 + $0xe8] sm:$0xff]
      %v603 = vld [vmem:[#allocation2 + $0xf0] sm:$0xff]
      %v604 = vld [vmem:[#allocation2 + $0xf8] sm:$0xff]
      %v605 = vpack.c.bf16 %v511, %v509
      %v606 = vpack.c.bf16 %v512, %v510
      %v607 = vpack.c.bf16 %v515, %v513
      %v608 = vpack.c.bf16 %v516, %v514
      %v609 = vpack.c.bf16 %v519, %v517
      %v610 = vpack.c.bf16 %v520, %v518
      %v611 = vpack.c.bf16 %v523, %v521
      %v612 = vpack.c.bf16 %v524, %v522
      %v613 = vpack.c.bf16 %v527, %v525
      %v614 = vpack.c.bf16 %v528, %v526
      %v615 = vpack.c.bf16 %v531, %v529
      %v616 = vpack.c.bf16 %v532, %v530
      %v617 = vpack.c.bf16 %v535, %v533
      %v618 = vpack.c.bf16 %v536, %v534
      %v619 = vpack.c.bf16 %v539, %v537
      %v620 = vpack.c.bf16 %v540, %v538
      %v621 = vpack.c.bf16 %v543, %v541
      %v622 = vpack.c.bf16 %v544, %v542
      %v623 = vpack.c.bf16 %v547, %v545
      %v624 = vpack.c.bf16 %v548, %v546
      %v625 = vpack.c.bf16 %v551, %v549
      %v626 = vpack.c.bf16 %v552, %v550
      %v627 = vpack.c.bf16 %v555, %v553
      %v628 = vpack.c.bf16 %v556, %v554
      %v629 = vpack.c.bf16 %v559, %v557
      %v630 = vpack.c.bf16 %v560, %v558
      %v631 = vpack.c.bf16 %v563, %v561
      %v632 = vpack.c.bf16 %v564, %v562
      %v633 = vpack.c.bf16 %v567, %v565
      %v634 = vpack.c.bf16 %v568, %v566
      %v635 = vpack.c.bf16 %v571, %v569
      %v636 = vpack.c.bf16 %v572, %v570
      %v637 = vld [vmem:[%s311] sm:$0xf]
      %v638 = vld [vmem:[%s311 + $0x4] sm:$0xf]
      %v639 = vld [vmem:[%s311 + $0x8] sm:$0xf]
      %v640 = vld [vmem:[%s311 + $0xc] sm:$0xf]
      %v641 = vld [vmem:[%s311 + $0x10] sm:$0xf]
      %v642 = vld [vmem:[%s311 + $0x14] sm:$0xf]
      %v643 = vld [vmem:[%s311 + $0x18] sm:$0xf]
      %v644 = vld [vmem:[%s311 + $0x1c] sm:$0xf]
      %v645 = vld [vmem:[%s311 + $0x20] sm:$0xf]
      %v646 = vld [vmem:[%s311 + $0x24] sm:$0xf]
      %v647 = vld [vmem:[%s311 + $0x28] sm:$0xf]
      %v648 = vld [vmem:[%s311 + $0x2c] sm:$0xf]
      %v649 = vld [vmem:[%s311 + $0x30] sm:$0xf]
      %v650 = vld [vmem:[%s311 + $0x34] sm:$0xf]
      %v651 = vld [vmem:[%s311 + $0x38] sm:$0xf]
      %v652 = vld [vmem:[%s311 + $0x3c] sm:$0xf]
      %v653 = vld [vmem:[%s311 + $0x40] sm:$0xf]
      %v654 = vld [vmem:[%s311 + $0x44] sm:$0xf]
      %v655 = vld [vmem:[%s311 + $0x48] sm:$0x3]
      %v675 = vunpack.c.l.b16 %v637
      %v676 = vunpack.c.l.b16 %v638
      %v677 = vunpack.c.l.b16 %v639
      %v678 = vunpack.c.l.b16 %v640
      %v679 = vunpack.c.l.b16 %v641
      %v680 = vunpack.c.l.b16 %v642
      %v681 = vunpack.c.l.b16 %v643
      %v682 = vunpack.c.l.b16 %v644
      %v683 = vunpack.c.l.b16 %v645
      %v684 = vunpack.c.l.b16 %v646
      %v685 = vunpack.c.l.b16 %v647
      %v686 = vunpack.c.l.b16 %v648
      %v687 = vunpack.c.l.b16 %v649
      %v688 = vunpack.c.l.b16 %v650
      %v689 = vunpack.c.l.b16 %v651
      %v690 = vunpack.c.l.b16 %v652
      %v691 = vunpack.c.l.b16 %v653
      %v692 = vunpack.c.l.b16 %v654
      %v693 = vunpack.c.l.b16 %v655
      %v694 = vpack.c.b16 %v676, %v675
      %v695 = vpack.c.b16 %v678, %v677
      %v696 = vpack.c.b16 %v680, %v679
      %v697 = vpack.c.b16 %v682, %v681
      %v698 = vpack.c.b16 %v684, %v683
      %v699 = vpack.c.b16 %v686, %v685
      %v700 = vpack.c.b16 %v688, %v687
      %v701 = vpack.c.b16 %v690, %v689
      %v702 = vpack.c.b16 %v692, %v691
      %v703 = vpack.c.b16 %v693, %v693
      %vm713 = vcmask 154624
      %v715 = vsel %vm713, %v606, 0
      %v718 = vsel %vm713, %v608, 0
      %v721 = vsel %vm713, %v610, 0
      %v724 = vsel %vm713, %v612, 0
      %v727 = vsel %vm713, %v614, 0
      %v730 = vsel %vm713, %v616, 0
      %v733 = vsel %vm713, %v618, 0
      %v736 = vsel %vm713, %v620, 0
      %v739 = vsel %vm713, %v622, 0
      %v742 = vsel %vm713, %v624, 0
      %v745 = vsel %vm713, %v626, 0
      %v748 = vsel %vm713, %v628, 0
      %v751 = vsel %vm713, %v630, 0
      %v754 = vsel %vm713, %v632, 0
      %v757 = vsel %vm713, %v634, 0
      %v760 = vsel %vm713, %v636, 0
      %vm762 = vcmask 1040384
      %vm763 = vcmask 1041408
      %v764 = vsel %vm762, 4294967295, 65535
      %v765 = vsel %vm763, %v764, 0
      %v767 = vand.u32 %v703, %v765
      %769 = vmatprep.subr.bf16.mxu0 0
      %770 = vmatpush1.bf16.msra.mxu0 %v701
      %771 = vmatprep.subr.bf16.mxu0 0
      %772 = vmatpush1.bf16.msra.mxu0 %v700
      %773 = vmatprep.subr.bf16.mxu0 0
      %774 = vmatpush1.bf16.msra.mxu0 %v699
      %775 = vmatprep.subr.bf16.mxu0 0
      %776 = vmatpush1.bf16.msra.mxu0 %v698
      %777 = vmatprep.subr.bf16.mxu0 0
      %778 = vmatpush1.bf16.msra.mxu0 %v697
      %779 = vmatprep.subr.bf16.mxu0 0
      %780 = vmatpush1.bf16.msra.mxu0 %v696
      %781 = vmatprep.subr.bf16.mxu0 0
      %782 = vmatpush1.bf16.msra.mxu0 %v695
      %783 = vmatprep.subr.bf16.mxu0 0
      %784 = vmatpush1.bf16.msra.mxu0 %v694
      %785 = vmatprep.subr.bf16.mxu0 0
      %786 = vmatpush2.bf16.msra.mxu0 0
      %787 = vmatprep.subr.bf16.mxu0 0
      %788 = vmatpush2.bf16.msra.mxu0 0
      %789 = vmatprep.subr.bf16.mxu0 0
      %790 = vmatpush2.bf16.msra.mxu0 0
      %791 = vmatprep.subr.bf16.mxu0 0
      %792 = vmatpush2.bf16.msra.mxu0 0
      %793 = vmatprep.subr.bf16.mxu0 0
      %794 = vmatpush2.bf16.msra.mxu0 0
      %795 = vmatprep.subr.bf16.mxu0 0
      %796 = vmatpush2.bf16.msra.mxu0 0
      %797 = vmatprep.subr.bf16.mxu0 0
      %798 = vmatpush2.bf16.msra.mxu0 %v767
      %799 = vmatprep.subr.bf16.mxu0 0
      %800 = vmatpush2.bf16.msra.mxu0 %v702
      %801 = vmatprep.mubr.bf16.mxu0 %v715
      %802 = vmatmul.mubr.bf16.gmra.mxu0 %v605
      %v803 = vpop.f32.mrf.mxu0
      %v804 = vadd.f32 0.0, %v803
      %v805 = vpop.f32.mrf.mxu0
      %v806 = vpop.f32.mrf.mxu0
      %v807 = vadd.f32 0.0, %v806
      %v808 = vpop.f32.mrf.mxu0
      %809 = vmatprep.mubr.bf16.mxu0 %v718
      %810 = vmatmul.mubr.bf16.gmra.mxu0 %v607
      %v811 = vpop.f32.mrf.mxu0
      %v812 = vadd.f32 0.0, %v811
      %v813 = vpop.f32.mrf.mxu0
      %v814 = vpop.f32.mrf.mxu0
      %v815 = vadd.f32 0.0, %v814
      %v816 = vpop.f32.mrf.mxu0
      %817 = vmatprep.mubr.bf16.mxu0 %v721
      %818 = vmatmul.mubr.bf16.gmra.mxu0 %v609
      %v819 = vpop.f32.mrf.mxu0
      %v820 = vadd.f32 0.0, %v819
      %v821 = vpop.f32.mrf.mxu0
      %v822 = vpop.f32.mrf.mxu0
      %v823 = vadd.f32 0.0, %v822
      %v824 = vpop.f32.mrf.mxu0
      %825 = vmatprep.mubr.bf16.mxu0 %v724
      %826 = vmatmul.mubr.bf16.gmra.mxu0 %v611
      %v827 = vpop.f32.mrf.mxu0
      %v828 = vadd.f32 0.0, %v827
      %v829 = vpop.f32.mrf.mxu0
      %v830 = vpop.f32.mrf.mxu0
      %v831 = vadd.f32 0.0, %v830
      %v832 = vpop.f32.mrf.mxu0
      %833 = vmatprep.mubr.bf16.mxu0 %v727
      %834 = vmatmul.mubr.bf16.gmra.mxu0 %v613
      %v835 = vpop.f32.mrf.mxu0
      %v836 = vadd.f32 0.0, %v835
      %v837 = vpop.f32.mrf.mxu0
      %v838 = vpop.f32.mrf.mxu0
      %v839 = vadd.f32 0.0, %v838
      %v840 = vpop.f32.mrf.mxu0
      %841 = vmatprep.mubr.bf16.mxu0 %v730
      %842 = vmatmul.mubr.bf16.gmra.mxu0 %v615
      %v843 = vpop.f32.mrf.mxu0
      %v844 = vadd.f32 0.0, %v843
      %v845 = vpop.f32.mrf.mxu0
      %v846 = vpop.f32.mrf.mxu0
      %v847 = vadd.f32 0.0, %v846
      %v848 = vpop.f32.mrf.mxu0
      %849 = vmatprep.mubr.bf16.mxu0 %v733
      %850 = vmatmul.mubr.bf16.gmra.mxu0 %v617
      %v851 = vpop.f32.mrf.mxu0
      %v852 = vadd.f32 0.0, %v851
      %v853 = vpop.f32.mrf.mxu0
      %v854 = vpop.f32.mrf.mxu0
      %v855 = vadd.f32 0.0, %v854
      %v856 = vpop.f32.mrf.mxu0
      %857 = vmatprep.mubr.bf16.mxu0 %v736
      %858 = vmatmul.mubr.bf16.gmra.mxu0 %v619
      %v859 = vpop.f32.mrf.mxu0
      %v860 = vadd.f32 0.0, %v859
      %v861 = vpop.f32.mrf.mxu0
      %v862 = vpop.f32.mrf.mxu0
      %v863 = vadd.f32 0.0, %v862
      %v864 = vpop.f32.mrf.mxu0
      %865 = vmatprep.mubr.bf16.mxu0 %v739
      %866 = vmatmul.mubr.bf16.gmra.mxu0 %v621
      %v867 = vpop.f32.mrf.mxu0
      %v868 = vadd.f32 0.0, %v867
      %v869 = vpop.f32.mrf.mxu0
      %v870 = vpop.f32.mrf.mxu0
      %v871 = vadd.f32 0.0, %v870
      %v872 = vpop.f32.mrf.mxu0
      %873 = vmatprep.mubr.bf16.mxu0 %v742
      %874 = vmatmul.mubr.bf16.gmra.mxu0 %v623
      %v875 = vpop.f32.mrf.mxu0
      %v876 = vadd.f32 0.0, %v875
      %v877 = vpop.f32.mrf.mxu0
      %v878 = vpop.f32.mrf.mxu0
      %v879 = vadd.f32 0.0, %v878
      %v880 = vpop.f32.mrf.mxu0
      %881 = vmatprep.mubr.bf16.mxu0 %v745
      %882 = vmatmul.mubr.bf16.gmra.mxu0 %v625
      %v883 = vpop.f32.mrf.mxu0
      %v884 = vadd.f32 0.0, %v883
      %v885 = vpop.f32.mrf.mxu0
      %v886 = vpop.f32.mrf.mxu0
      %v887 = vadd.f32 0.0, %v886
      %v888 = vpop.f32.mrf.mxu0
      %889 = vmatprep.mubr.bf16.mxu0 %v748
      %890 = vmatmul.mubr.bf16.gmra.mxu0 %v627
      %v891 = vpop.f32.mrf.mxu0
      %v892 = vadd.f32 0.0, %v891
      %v893 = vpop.f32.mrf.mxu0
      %v894 = vpop.f32.mrf.mxu0
      %v895 = vadd.f32 0.0, %v894
      %v896 = vpop.f32.mrf.mxu0
      %897 = vmatprep.mubr.bf16.mxu0 %v751
      %898 = vmatmul.mubr.bf16.gmra.mxu0 %v629
      %v899 = vpop.f32.mrf.mxu0
      %v900 = vadd.f32 0.0, %v899
      %v901 = vpop.f32.mrf.mxu0
      %v902 = vpop.f32.mrf.mxu0
      %v903 = vadd.f32 0.0, %v902
      %v904 = vpop.f32.mrf.mxu0
      %905 = vmatprep.mubr.bf16.mxu0 %v754
      %906 = vmatmul.mubr.bf16.gmra.mxu0 %v631
      %v907 = vpop.f32.mrf.mxu0
      %v908 = vadd.f32 0.0, %v907
      %v909 = vpop.f32.mrf.mxu0
      %v910 = vpop.f32.mrf.mxu0
      %v911 = vadd.f32 0.0, %v910
      %v912 = vpop.f32.mrf.mxu0
      %913 = vmatprep.mubr.bf16.mxu0 %v757
      %914 = vmatmul.mubr.bf16.gmra.mxu0 %v633
      %v915 = vpop.f32.mrf.mxu0
      %v916 = vadd.f32 0.0, %v915
      %v917 = vpop.f32.mrf.mxu0
      %v918 = vpop.f32.mrf.mxu0
      %v919 = vadd.f32 0.0, %v918
      %v920 = vpop.f32.mrf.mxu0
      %921 = vmatprep.mubr.bf16.mxu0 %v760
      %922 = vmatmul.mubr.bf16.gmra.mxu0 %v635
      %v923 = vpop.f32.mrf.mxu0
      %v924 = vadd.f32 0.0, %v923
      %v925 = vpop.f32.mrf.mxu0
      %v926 = vpop.f32.mrf.mxu0
      %v927 = vadd.f32 0.0, %v926
      %v928 = vpop.f32.mrf.mxu0
      %929 = vdwg.mxu0
      %v930 = vadd.f32 %v573, %v804
      %v931 = vadd.f32 %v574, %v807
      %v932 = vadd.f32 %v575, %v812
      %v933 = vadd.f32 %v576, %v815
      %v934 = vadd.f32 %v577, %v820
      %v935 = vadd.f32 %v578, %v823
      %v936 = vadd.f32 %v579, %v828
      %v937 = vadd.f32 %v580, %v831
      %v938 = vadd.f32 %v581, %v836
      %v939 = vadd.f32 %v582, %v839
      %v940 = vadd.f32 %v583, %v844
      %v941 = vadd.f32 %v584, %v847
      %v942 = vadd.f32 %v585, %v852
      %v943 = vadd.f32 %v586, %v855
      %v944 = vadd.f32 %v587, %v860
      %v945 = vadd.f32 %v588, %v863
      %v946 = vadd.f32 %v589, %v868
      %v947 = vadd.f32 %v590, %v871
      %v948 = vadd.f32 %v591, %v876
      %v949 = vadd.f32 %v592, %v879
      %v950 = vadd.f32 %v593, %v884
      %v951 = vadd.f32 %v594, %v887
      %v952 = vadd.f32 %v595, %v892
      %v953 = vadd.f32 %v596, %v895
      %v954 = vadd.f32 %v597, %v900
      %v955 = vadd.f32 %v598, %v903
      %v956 = vadd.f32 %v599, %v908
      %v957 = vadd.f32 %v600, %v911
      %v958 = vadd.f32 %v601, %v916
      %v959 = vadd.f32 %v602, %v919
      %v960 = vadd.f32 %v603, %v924
      %v961 = vadd.f32 %v604, %v927
      %vm962 = vcmask 523264
      %963 = vst.msk [vmem:[#allocation2] sm:$0xff] %vm962, %v930
      %964 = vst.msk [vmem:[#allocation2 + $0x8] sm:$0xff] %vm962, %v931
      %965 = vst.msk [vmem:[#allocation2 + $0x10] sm:$0xff] %vm962, %v932
      %966 = vst.msk [vmem:[#allocation2 + $0x18] sm:$0xff] %vm962, %v933
      %967 = vst.msk [vmem:[#allocation2 + $0x20] sm:$0xff] %vm962, %v934
      %968 = vst.msk [vmem:[#allocation2 + $0x28] sm:$0xff] %vm962, %v935
      %969 = vst.msk [vmem:[#allocation2 + $0x30] sm:$0xff] %vm962, %v936
      %970 = vst.msk [vmem:[#allocation2 + $0x38] sm:$0xff] %vm962, %v937
      %971 = vst.msk [vmem:[#allocation2 + $0x40] sm:$0xff] %vm962, %v938
      %972 = vst.msk [vmem:[#allocation2 + $0x48] sm:$0xff] %vm962, %v939
      %973 = vst.msk [vmem:[#allocation2 + $0x50] sm:$0xff] %vm962, %v940
      %974 = vst.msk [vmem:[#allocation2 + $0x58] sm:$0xff] %vm962, %v941
      %975 = vst.msk [vmem:[#allocation2 + $0x60] sm:$0xff] %vm962, %v942
      %976 = vst.msk [vmem:[#allocation2 + $0x68] sm:$0xff] %vm962, %v943
      %977 = vst.msk [vmem:[#allocation2 + $0x70] sm:$0xff] %vm962, %v944
      %978 = vst.msk [vmem:[#allocation2 + $0x78] sm:$0xff] %vm962, %v945
      %979 = vst.msk [vmem:[#allocation2 + $0x80] sm:$0xff] %vm962, %v946
      %980 = vst.msk [vmem:[#allocation2 + $0x88] sm:$0xff] %vm962, %v947
      %981 = vst.msk [vmem:[#allocation2 + $0x90] sm:$0xff] %vm962, %v948
      %982 = vst.msk [vmem:[#allocation2 + $0x98] sm:$0xff] %vm962, %v949
      %983 = vst.msk [vmem:[#allocation2 + $0xa0] sm:$0xff] %vm962, %v950
      %984 = vst.msk [vmem:[#allocation2 + $0xa8] sm:$0xff] %vm962, %v951
      %985 = vst.msk [vmem:[#allocation2 + $0xb0] sm:$0xff] %vm962, %v952
      %986 = vst.msk [vmem:[#allocation2 + $0xb8] sm:$0xff] %vm962, %v953
      %987 = vst.msk [vmem:[#allocation2 + $0xc0] sm:$0xff] %vm962, %v954
      %988 = vst.msk [vmem:[#allocation2 + $0xc8] sm:$0xff] %vm962, %v955
      %989 = vst.msk [vmem:[#allocation2 + $0xd0] sm:$0xff] %vm962, %v956
      %990 = vst.msk [vmem:[#allocation2 + $0xd8] sm:$0xff] %vm962, %v957
      %991 = vst.msk [vmem:[#allocation2 + $0xe0] sm:$0xff] %vm962, %v958
      %992 = vst.msk [vmem:[#allocation2 + $0xe8] sm:$0xff] %vm962, %v959
      %993 = vst.msk [vmem:[#allocation2 + $0xf0] sm:$0xff] %vm962, %v960
      %994 = vst.msk [vmem:[#allocation2 + $0xf8] sm:$0xff] %vm962, %v961
      // Predicated region
      $region45: #{fused_matmul.1} parent=39 // pred_check
        %p995 = pneg %p320
      $region46: #{fused_matmul.1} parent=39 // pred_check_branch
        %997 = sbr.rel (%p995) target = $region48
      $region47: #{fused_matmul.1} parent=39 // pred_region
        %v998 = vld [vmem:[#allocation2] sm:$0xff]
        %v999 = vld [vmem:[#allocation2 + $0x8] sm:$0xff]
        %v1000 = vld [vmem:[#allocation2 + $0x10] sm:$0xff]
        %v1001 = vld [vmem:[#allocation2 + $0x18] sm:$0xff]
        %v1002 = vld [vmem:[#allocation2 + $0x20] sm:$0xff]
        %v1003 = vld [vmem:[#allocation2 + $0x28] sm:$0xff]
        %v1004 = vld [vmem:[#allocation2 + $0x30] sm:$0xff]
        %v1005 = vld [vmem:[#allocation2 + $0x38] sm:$0xff]
        %v1006 = vld [vmem:[#allocation2 + $0x40] sm:$0xff]
        %v1007 = vld [vmem:[#allocation2 + $0x48] sm:$0xff]
        %v1008 = vld [vmem:[#allocation2 + $0x50] sm:$0xff]
        %v1009 = vld [vmem:[#allocation2 + $0x58] sm:$0xff]
        %v1010 = vld [vmem:[#allocation2 + $0x60] sm:$0xff]
        %v1011 = vld [vmem:[#allocation2 + $0x68] sm:$0xff]
        %v1012 = vld [vmem:[#allocation2 + $0x70] sm:$0xff]
        %v1013 = vld [vmem:[#allocation2 + $0x78] sm:$0xff]
        %v1014 = vld [vmem:[#allocation2 + $0x80] sm:$0xff]
        %v1015 = vld [vmem:[#allocation2 + $0x88] sm:$0xff]
        %v1016 = vld [vmem:[#allocation2 + $0x90] sm:$0xff]
        %v1017 = vld [vmem:[#allocation2 + $0x98] sm:$0xff]
        %v1018 = vld [vmem:[#allocation2 + $0xa0] sm:$0xff]
        %v1019 = vld [vmem:[#allocation2 + $0xa8] sm:$0xff]
        %v1020 = vld [vmem:[#allocation2 + $0xb0] sm:$0xff]
        %v1021 = vld [vmem:[#allocation2 + $0xb8] sm:$0xff]
        %v1022 = vld [vmem:[#allocation2 + $0xc0] sm:$0xff]
        %v1023 = vld [vmem:[#allocation2 + $0xc8] sm:$0xff]
        %v1024 = vld [vmem:[#allocation2 + $0xd0] sm:$0xff]
        %v1025 = vld [vmem:[#allocation2 + $0xd8] sm:$0xff]
        %v1026 = vld [vmem:[#allocation2 + $0xe0] sm:$0xff]
        %v1027 = vld [vmem:[#allocation2 + $0xe8] sm:$0xff]
        %v1028 = vld [vmem:[#allocation2 + $0xf0] sm:$0xff]
        %v1029 = vld [vmem:[#allocation2 + $0xf8] sm:$0xff]
        %v1030 = vld [vmem:[%s4] sm:$0x1]
        %v1032 = vlaneseq
        %v1033 = vshrl.u32 %v1032, 7
        %v1034 = vsub.s32 0, %v1033
        %v1035 = vrot.slane %v1030, %v1034
        %v1037 = vadd.f32 %v998, %v1035
        %v1038 = vadd.f32 %v999, %v1035
        %v1039 = vadd.f32 %v1000, %v1035
        %v1040 = vadd.f32 %v1001, %v1035
        %v1041 = vadd.f32 %v1002, %v1035
        %v1042 = vadd.f32 %v1003, %v1035
        %v1043 = vadd.f32 %v1004, %v1035
        %v1044 = vadd.f32 %v1005, %v1035
        %v1045 = vadd.f32 %v1006, %v1035
        %v1046 = vadd.f32 %v1007, %v1035
        %v1047 = vadd.f32 %v1008, %v1035
        %v1048 = vadd.f32 %v1009, %v1035
        %v1049 = vadd.f32 %v1010, %v1035
        %v1050 = vadd.f32 %v1011, %v1035
        %v1051 = vadd.f32 %v1012, %v1035
        %v1052 = vadd.f32 %v1013, %v1035
        %v1053 = vadd.f32 %v1014, %v1035
        %v1054 = vadd.f32 %v1015, %v1035
        %v1055 = vadd.f32 %v1016, %v1035
        %v1056 = vadd.f32 %v1017, %v1035
        %v1057 = vadd.f32 %v1018, %v1035
        %v1058 = vadd.f32 %v1019, %v1035
        %v1059 = vadd.f32 %v1020, %v1035
        %v1060 = vadd.f32 %v1021, %v1035
        %v1061 = vadd.f32 %v1022, %v1035
        %v1062 = vadd.f32 %v1023, %v1035
        %v1063 = vadd.f32 %v1024, %v1035
        %v1064 = vadd.f32 %v1025, %v1035
        %v1065 = vadd.f32 %v1026, %v1035
        %v1066 = vadd.f32 %v1027, %v1035
        %v1067 = vadd.f32 %v1028, %v1035
        %v1068 = vadd.f32 %v1029, %v1035
        %v1069 = vmax.f32 %v1037, 0.0
        %v1070 = vmax.f32 %v1038, 0.0
        %v1071 = vmax.f32 %v1039, 0.0
        %v1072 = vmax.f32 %v1040, 0.0
        %v1073 = vmax.f32 %v1041, 0.0
        %v1074 = vmax.f32 %v1042, 0.0
        %v1075 = vmax.f32 %v1043, 0.0
        %v1076 = vmax.f32 %v1044, 0.0
        %v1077 = vmax.f32 %v1045, 0.0
        %v1078 = vmax.f32 %v1046, 0.0
        %v1079 = vmax.f32 %v1047, 0.0
        %v1080 = vmax.f32 %v1048, 0.0
        %v1081 = vmax.f32 %v1049, 0.0
        %v1082 = vmax.f32 %v1050, 0.0
        %v1083 = vmax.f32 %v1051, 0.0
        %v1084 = vmax.f32 %v1052, 0.0
        %v1085 = vmax.f32 %v1053, 0.0
        %v1086 = vmax.f32 %v1054, 0.0
        %v1087 = vmax.f32 %v1055, 0.0
        %v1088 = vmax.f32 %v1056, 0.0
        %v1089 = vmax.f32 %v1057, 0.0
        %v1090 = vmax.f32 %v1058, 0.0
        %v1091 = vmax.f32 %v1059, 0.0
        %v1092 = vmax.f32 %v1060, 0.0
        %v1093 = vmax.f32 %v1061, 0.0
        %v1094 = vmax.f32 %v1062, 0.0
        %v1095 = vmax.f32 %v1063, 0.0
        %v1096 = vmax.f32 %v1064, 0.0
        %v1097 = vmax.f32 %v1065, 0.0
        %v1098 = vmax.f32 %v1066, 0.0
        %v1099 = vmax.f32 %v1067, 0.0
        %v1100 = vmax.f32 %v1068, 0.0
        %1101 = vst.msk [vmem:[%s317] sm:$0xff] %vm962, %v1069
        %1102 = vst.msk [vmem:[%s317 + $0x8] sm:$0xff] %vm962, %v1070
        %1103 = vst.msk [vmem:[%s317 + $0x10] sm:$0xff] %vm962, %v1071
        %1104 = vst.msk [vmem:[%s317 + $0x18] sm:$0xff] %vm962, %v1072
        %1105 = vst.msk [vmem:[%s317 + $0x20] sm:$0xff] %vm962, %v1073
        %1106 = vst.msk [vmem:[%s317 + $0x28] sm:$0xff] %vm962, %v1074
        %1107 = vst.msk [vmem:[%s317 + $0x30] sm:$0xff] %vm962, %v1075
        %1108 = vst.msk [vmem:[%s317 + $0x38] sm:$0xff] %vm962, %v1076
        %1109 = vst.msk [vmem:[%s317 + $0x40] sm:$0xff] %vm962, %v1077
        %1110 = vst.msk [vmem:[%s317 + $0x48] sm:$0xff] %vm962, %v1078
        %1111 = vst.msk [vmem:[%s317 + $0x50] sm:$0xff] %vm962, %v1079
        %1112 = vst.msk [vmem:[%s317 + $0x58] sm:$0xff] %vm962, %v1080
        %1113 = vst.msk [vmem:[%s317 + $0x60] sm:$0xff] %vm962, %v1081
        %1114 = vst.msk [vmem:[%s317 + $0x68] sm:$0xff] %vm962, %v1082
        %1115 = vst.msk [vmem:[%s317 + $0x70] sm:$0xff] %vm962, %v1083
        %1116 = vst.msk [vmem:[%s317 + $0x78] sm:$0xff] %vm962, %v1084
        %1117 = vst.msk [vmem:[%s317 + $0x80] sm:$0xff] %vm962, %v1085
        %1118 = vst.msk [vmem:[%s317 + $0x88] sm:$0xff] %vm962, %v1086
        %1119 = vst.msk [vmem:[%s317 + $0x90] sm:$0xff] %vm962, %v1087
        %1120 = vst.msk [vmem:[%s317 + $0x98] sm:$0xff] %vm962, %v1088
        %1121 = vst.msk [vmem:[%s317 + $0xa0] sm:$0xff] %vm962, %v1089
        %1122 = vst.msk [vmem:[%s317 + $0xa8] sm:$0xff] %vm962, %v1090
        %1123 = vst.msk [vmem:[%s317 + $0xb0] sm:$0xff] %vm962, %v1091
        %1124 = vst.msk [vmem:[%s317 + $0xb8] sm:$0xff] %vm962, %v1092
        %1125 = vst.msk [vmem:[%s317 + $0xc0] sm:$0xff] %vm962, %v1093
        %1126 = vst.msk [vmem:[%s317 + $0xc8] sm:$0xff] %vm962, %v1094
        %1127 = vst.msk [vmem:[%s317 + $0xd0] sm:$0xff] %vm962, %v1095
        %1128 = vst.msk [vmem:[%s317 + $0xd8] sm:$0xff] %vm962, %v1096
        %1129 = vst.msk [vmem:[%s317 + $0xe0] sm:$0xff] %vm962, %v1097
        %1130 = vst.msk [vmem:[%s317 + $0xe8] sm:$0xff] %vm962, %v1098
        %1131 = vst.msk [vmem:[%s317 + $0xf0] sm:$0xff] %vm962, %v1099
        %1132 = vst.msk [vmem:[%s317 + $0xf8] sm:$0xff] %vm962, %v1100
      $region48: #{fused_matmul.1} parent=39 // pred_fallthru
        _
      %s1133 = smul.u32 32, %s20
      %p1134 = scmp.lt.s32.totalorder %s1133, 63
      %s1135 = scalar_select %p1134, %s1133, 63
      %s1136 = smul.addr %s1135, 8
      %s1137 = scalar_lea.vmem %s5, %s1136
      // Predicated region
      $region49: #{fused_matmul.1} parent=39 // pred_check
        %p1138 = pneg %p173
      $region50: #{fused_matmul.1} parent=39 // pred_check_branch
        %1140 = sbr.rel (%p1138) target = $region52
      $region51: #{fused_matmul.1} parent=39 // pred_region
        %s1141 = smul.u32 32, %s20
      $region52: #{fused_matmul.1} parent=39 // pred_fallthru
        _
    $region40: #{fused_matmul.1} parent=5 // pred_fallthru
      _
    %p1142 = scmp.le.s32.totalorder 2, %s11
    // Predicated region
    $region53: #{fused_matmul.1} parent=5 // pred_check
      %p1143 = pneg %p1142
    $region54: #{fused_matmul.1} parent=5 // pred_check_branch
      %1145 = sbr.rel (%p1143) target = $region56
    $region55: #{fused_matmul.1} parent=5 // pred_region
      %s1146 = ssub.s32 %s11, 2
      // Predicated region
      $region57: #{fused_matmul.1} parent=55 // pred_check
        %p1147 = pneg %p179
      $region58: #{fused_matmul.1} parent=55 // pred_check_branch
        %1149 = sbr.rel (%p1147) target = $region60
      $region59: #{fused_matmul.1} parent=55 // pred_region
        %s1150 = smul.u32 32, %s22
        %p1151 = scmp.lt.s32.totalorder %s1150, 63
        %s1152 = scalar_select %p1151, %s1150, 63
        %s1153 = smul.addr %s1152, 8
        %s1154 = scalar_lea.vmem %s5, %s1153
      $region60: #{fused_matmul.1} parent=55 // pred_fallthru
        _
    $region56: #{fused_matmul.1} parent=5 // pred_fallthru
      _
  $region6: #{fused_matmul.1} parent=0 // loop_footer
    %s15 = sadd.s32 1, %s11
  $region7: #{fused_matmul.1} parent=0 // loop_footer_branch
    %10 = sbr.rel target = $region3
  $region8: #{fused_matmul.1} parent=0 // loop_exit
    _

</llo_original>
